<compile_context>
chip_gen: v7x
topology: tpu7x:2x2x1
jax: 0.10.0
libtpu: 0.0.40
codegen_flags: <defaults>
</compile_context>

<pallas_src>
import functools
import math

import numpy as np

import jax
import jax.numpy as jnp
from jax.experimental import pallas as pl
from jax.experimental.pallas import tpu as pltpu

_INV_SQRT2 = 1.0 / math.sqrt(2.0)


# ------------------------- Pallas kernel 1: causal conv ---------------------

def s4_causal_conv_kernel(x_ref, kblk_ref, y_ref):
    """Blocked causal depthwise (Toeplitz) convolution.

    Grid = (l_blocks, m_blocks); m (reduction) is innermost / "arbitrary".
      x_ref   : (H, TL, B)  channel-major input block m = j           (bf16)
      kblk_ref: (H, TL, TL) Toeplitz block for block-lag d = i - j    (bf16)
      y_ref   : (H, TL, B)  f32 conv output block l = i; doubles as the
                            accumulator (resident across the j axis).
    Dead steps (j > i) do no compute; their index maps are clamped so they
    also issue no DMA.
    """
    i = pl.program_id(0)          # output (l) block
    j = pl.program_id(1)          # reduction (m) block, innermost

    @pl.when(j == 0)
    def _init():
        y_ref[...] = jnp.zeros_like(y_ref)

    @pl.when(j <= i)
    def _accumulate():
        # Batched-over-h MXU matmul with batch B as the N dimension:
        #   y[h, l, b] += sum_m kblk[h, l, m] * x[h, m, b]
        y_ref[...] += jnp.einsum(
            "hlm,hmb->hlb", kblk_ref[...], x_ref[...],
            preferred_element_type=jnp.float32)


# ---------------------- Pallas kernel 2: pointwise tail ---------------------

def s4_pointwise_kernel(hidden, y_ref, x_ref, d_ref, wt_ref, b_ref, o_ref):
    """D-skip, GELU, 1x1 Conv1d, GLU, residual -- all lane-dense in H.

    Grid = (batch, l_blocks).
      y_ref : (TL, H)  f32 conv output rows
      x_ref : (TL, H)  f32 residual rows (original input)
      d_ref : (1, H)   f32 skip parameter D (lane-major)
      wt_ref: (H, 2H)  bf16 transposed 1x1 Conv1d weight
      b_ref : (1, 2H)  f32 Conv1d bias (lane-major)
      o_ref : (TL, H)  f32 output rows (lane-dense store)
    """
    x_l = x_ref[...]
    y = y_ref[...] + x_l * d_ref[...]                    # D skip
    # TODO(synk): training-mode dropout (stateful RNG mask) not implemented.
    y = 0.5 * y * (1.0 + jax.lax.erf(y * _INV_SQRT2))    # exact (erf) GELU
    # 1x1 Conv1d as a (TL, H) @ (H, 2H) MXU matmul: bf16 operands, f32 acc.
    z = jnp.dot(y.astype(wt_ref.dtype), wt_ref[...],
                preferred_element_type=jnp.float32) + b_ref[...]
    o_ref[...] = z[:, :hidden] * jax.nn.sigmoid(z[:, hidden:]) + x_l  # GLU + res


# ----------------------------- JAX glue --------------------------------------

def compute_s4_kernel(params, L):
    """S4ConvKernel.forward(L) -> real kernel k of shape (H, L) (f32)."""
    dt = jnp.exp(params["log_dt"])                             # (H,)
    C = params["C_re"] + 1j * params["C_im"]                   # (H, N/2)
    A = -jnp.exp(params["log_A_re"]) + 1j * params["A_im"]     # (H, N/2)
    dtA = A * dt[:, None]                                      # (H, N/2)
    K = dtA[:, :, None] * jnp.arange(L, dtype=jnp.float32)     # (H, N/2, L)
    Cc = C * (jnp.exp(dtA) - 1.0) / A
    k = 2.0 * jnp.real(jnp.einsum("hn,hnl->hl", Cc, jnp.exp(K)))
    return k.astype(jnp.float32)                               # (H, L)


def build_block_toeplitz(k, tl, dtype):
    """kblk[d, h, a, c] = k[h, d*tl + a - c] if the lag is >= 0, else 0.

    Only the distinct block-diagonals of the causal Toeplitz operator are
    stored: (L/tl, H, tl, tl).  Built directly in `dtype` (no f32 intermediate
    of size H*L*tl), with the lower-triangular mask baked into the d=0 block.
    """
    H, L = k.shape
    nd = L // tl
    kq = k.astype(dtype)                                       # cast first (tiny)
    lag = (jnp.arange(nd)[:, None, None] * tl
           + jnp.arange(tl)[None, :, None]
           - jnp.arange(tl)[None, None, :])                    # (nd, tl, tl)
    kb = kq[:, jnp.clip(lag, 0, L - 1)]                        # (H, nd, tl, tl)
    kb = jnp.where(lag[None] >= 0, kb, jnp.zeros((), dtype))
    return jnp.transpose(kb, (1, 0, 2, 3))                     # (nd, H, tl, tl)


def _vmem_limit(block_bytes, headroom=4 * 1024 * 1024):
    """Double-buffered block footprint + headroom, clamped to sane bounds."""
    total = 2 * sum(block_bytes) + headroom
    return int(min(max(total, 8 * 1024 * 1024), 100 * 1024 * 1024))


def s4_conv_block_forward(x, params, *, seq_tile=None, conv_dtype=jnp.bfloat16):
    """x: (B, L, H) float32 -> (B, L, H) float32."""
    B, L, H = x.shape
    if seq_tile is None:
        seq_tile = 128 if L % 128 == 0 else L
    TL = seq_tile
    assert L % TL == 0 and (TL == L or TL % 8 == 0), "bad seq_tile"
    n_l = L // TL
    it = int(np.dtype(conv_dtype).itemsize)

    x = x.astype(jnp.float32)
    k = compute_s4_kernel(params, L)                           # (H, L) f32
    kblk = build_block_toeplitz(k, TL, conv_dtype)             # (n_l, H, TL, TL)
    x_cm = jnp.transpose(x, (2, 1, 0)).astype(conv_dtype)      # (H, L, B) bf16

    # ---- stage 1: blocked causal depthwise conv (hot loop) ------------------
    n_useful = n_l * (n_l + 1) // 2
    conv_cost = pl.CostEstimate(
        flops=2 * n_useful * H * TL * TL * B,
        transcendentals=0,
        bytes_accessed=n_useful * H * TL * (TL + B) * it + H * L * B * (it + 4),
    )
    conv_vmem = _vmem_limit([H * TL * TL * it,      # kblk block
                             H * TL * B * it,       # x block
                             H * TL * B * 4])       # out (accumulator) block

    y_cm = pl.pallas_call(
        s4_causal_conv_kernel,
        out_shape=jax.ShapeDtypeStruct((H, L, B), jnp.float32),
        grid=(n_l, n_l),
        in_specs=[
            # Channel-major x block m = j; clamped so dead steps re-use block i
            # (no extra DMA for the skipped upper triangle).
            pl.BlockSpec((H, TL, B), lambda i, j: (0, jnp.minimum(j, i), 0)),
            # Toeplitz block for block-lag d = i - j; clamped to 0 for dead
            # steps (j > i).  Compute is gated by pl.when(j <= i) -- keep the
            # clamp and the guard in sync.
            pl.BlockSpec((pl.Squeezed(), H, TL, TL),
                         lambda i, j: (jnp.maximum(i - j, 0), 0, 0, 0)),
        ],
        out_specs=pl.BlockSpec((H, TL, B), lambda i, j: (0, i, 0)),
        compiler_params=pltpu.CompilerParams(
            dimension_semantics=("parallel", "arbitrary"),
            vmem_limit_bytes=conv_vmem),
        cost_estimate=conv_cost,
    )(x_cm, kblk)

    # Single h-major -> h-minor layout change, done once by XLA (O(B*L*H)).
    y = jnp.transpose(y_cm, (2, 1, 0))                         # (B, L, H) f32

    # ---- stage 2: pointwise tail (D-skip, GELU, 1x1 conv, GLU, residual) ----
    d_row = params["D"].reshape(1, H).astype(jnp.float32)              # (1, H)
    w_t = params["conv_w"].reshape(2 * H, H).T.astype(conv_dtype)      # (H, 2H)
    b_row = params["conv_b"].reshape(1, 2 * H).astype(jnp.float32)     # (1, 2H)

    pw_cost = pl.CostEstimate(
        flops=2 * B * L * H * 2 * H + 12 * B * L * H,
        transcendentals=2 * B * L * H,
        bytes_accessed=3 * B * L * H * 4 + 2 * H * H * it,
    )
    pw_vmem = _vmem_limit([TL * H * 4, TL * H * 4, TL * H * 4,
                           2 * H * H * it, 2 * H * 4, H * 4])

    out = pl.pallas_call(
        functools.partial(s4_pointwise_kernel, H),
        out_shape=jax.ShapeDtypeStruct((B, L, H), jnp.float32),
        grid=(B, n_l),
        in_specs=[
            pl.BlockSpec((pl.Squeezed(), TL, H), lambda b, i: (b, i, 0)),  # y
            pl.BlockSpec((pl.Squeezed(), TL, H), lambda b, i: (b, i, 0)),  # x
            pl.BlockSpec((1, H), lambda b, i: (0, 0)),                     # D
            pl.BlockSpec((H, 2 * H), lambda b, i: (0, 0)),                 # W^T
            pl.BlockSpec((1, 2 * H), lambda b, i: (0, 0)),                 # bias
        ],
        out_specs=pl.BlockSpec((pl.Squeezed(), TL, H), lambda b, i: (b, i, 0)),
        compiler_params=pltpu.CompilerParams(
            dimension_semantics=("parallel", "parallel"),
            vmem_limit_bytes=pw_vmem),
        cost_estimate=pw_cost,
    )(y, x, d_row, w_t, b_row)
    return out


# ----------------------------- reference (pure JAX) --------------------------

def reference_forward(x, params):
    B, L, H = x.shape
    k = compute_s4_kernel(params, L)                           # (H, L)
    xt = jnp.swapaxes(x, -1, -2)                               # (B, H, L)
    x_fft = jnp.fft.rfft(xt, n=2 * L)
    k_fft = jnp.fft.rfft(k, n=2 * L)
    y = jnp.fft.irfft(x_fft * k_fft, n=2 * L)[..., :L]
    y = y + xt * params["D"][:, None]
    y = jax.nn.gelu(y, approximate=False)
    W = params["conv_w"].reshape(2 * H, H)
    z = jnp.einsum("ch,bhl->bcl", W, y) + params["conv_b"][None, :, None]
    out = z[:, :H, :] * jax.nn.sigmoid(z[:, H:, :])
    return jnp.swapaxes(out, -1, -2) + x


# ----------------------------- parameter init --------------------------------

def init_params(key, H, N):
    ks = jax.random.split(key, 8)
    log_dt = (jax.random.uniform(ks[0], (H,))
              * (math.log(0.1) - math.log(0.001)) + math.log(0.001))
    C_re = jax.random.normal(ks[1], (H, N // 2))
    C_im = jax.random.normal(ks[2], (H, N // 2))
    log_A_re = jax.random.normal(ks[3], (H, N // 2))
    A_im = jnp.ones((H, N // 2))
    D = jax.random.normal(ks[4], (H,))
    bound = 1.0 / math.sqrt(H)
    conv_w = jax.random.uniform(ks[5], (2 * H, H, 1), minval=-bound, maxval=bound)
    conv_b = jax.random.uniform(ks[6], (2 * H,), minval=-bound, maxval=bound)
    return {
        "log_dt": log_dt.astype(jnp.float32),
        "C_re": C_re.astype(jnp.float32),
        "C_im": C_im.astype(jnp.float32),
        "log_A_re": log_A_re.astype(jnp.float32),
        "A_im": A_im.astype(jnp.float32),
        "D": D.astype(jnp.float32),
        "conv_w": conv_w.astype(jnp.float32),
        "conv_b": conv_b.astype(jnp.float32),
    }


# ----------------------------- main ------------------------------------------

if __name__ == "__main__":
    # batch, seq, model dim, state dim.  B=8 keeps the conv-matmul N dimension
    # non-trivial; seq_tile=8 exercises the blocked causal path (2 l-blocks x
    # 2 m-blocks): masked diagonal block, full off-diagonal block, skipped
    # (no-compute / no-DMA) upper block, and the accumulator init.
    B, L, H, N = 8, 16, 32, 8

    key = jax.random.PRNGKey(0)
    pkey, xkey = jax.random.split(key)
    params = init_params(pkey, H, N)
    x = jax.random.normal(xkey, (B, L, H), dtype=jnp.float32)

    out = s4_conv_block_forward(x, params, seq_tile=8)
    out = jax.block_until_ready(out)

    ref = jax.block_until_ready(reference_forward(x, params))
    # bf16 MXU operands (f32 accumulation) for the conv and 1x1-conv -> looser
    # tolerance; re-validate at production L if keeping bf16 x.
    np.testing.assert_allclose(np.asarray(out), np.asarray(ref),
                               rtol=5e-2, atol=5e-2)

    print("KERNEL_OK")
</pallas_src>

<mosaic_0001>
module attributes {stable_mosaic.version = 11 : i64} {
  func.func @s4_causal_conv_kernel(%arg0: i32, %arg1: i32, %arg2: memref<32x8x8xbf16, #tpu.memory_space<vmem>>, %arg3: memref<1x32x8x8xbf16, #tpu.memory_space<vmem>>, %arg4: memref<32x8x8xf32, #tpu.memory_space<vmem>>) attributes {dimension_semantics = [#tpu.dimension_semantics<parallel>, #tpu.dimension_semantics<arbitrary>], iteration_bounds = array<i64: 2, 2>, scalar_prefetch = 0 : i64, scratch_operands = 0 : i64, tpu.core_type = #tpu.core_type<tc>, window_params = [{transform_indices = @transform_0, window_bounds = array<i64: 32, 8, 8>}, {transform_indices = @transform_1, window_bounds = array<i64: 1, 32, 8, 8>}, {transform_indices = @transform_2, window_bounds = array<i64: 32, 8, 8>}]} {
    %c0_i32 = arith.constant 0 : i32
    %0 = arith.cmpi eq, %arg1, %c0_i32 : i32
    %1 = arith.extui %0 : i1 to i32
    %c0_i32_0 = arith.constant 0 : i32
    %2 = arith.cmpi ne, %1, %c0_i32_0 : i32
    scf.if %2 {
      %cst = arith.constant 0.000000e+00 : f32
      %6 = vector.broadcast %cst : f32 to vector<32x8x8xf32>
      %c0 = arith.constant 0 : index
      %c0_2 = arith.constant 0 : index
      %c0_3 = arith.constant 0 : index
      %7 = vector.load %arg4[%c0, %c0_2, %c0_3] : memref<32x8x8xf32, #tpu.memory_space<vmem>>, vector<32x8x8xf32>
      tpu.vector_store %arg4[%c0, %c0_2, %c0_3], %6 {strides = array<i32>} : memref<32x8x8xf32, #tpu.memory_space<vmem>>, vector<32x8x8xf32>,
    } else {
    }
    %3 = arith.cmpi sle, %arg1, %arg0 : i32
    %4 = arith.extui %3 : i1 to i32
    %c0_i32_1 = arith.constant 0 : i32
    %5 = arith.cmpi ne, %4, %c0_i32_1 : i32
    scf.if %5 {
      %c0 = arith.constant 0 : index
      %c0_2 = arith.constant 0 : index
      %c0_3 = arith.constant 0 : index
      %6 = vector.load %arg4[%c0, %c0_2, %c0_3] : memref<32x8x8xf32, #tpu.memory_space<vmem>>, vector<32x8x8xf32>
      %c0_4 = arith.constant 0 : index
      %c0_5 = arith.constant 0 : index
      %c0_6 = arith.constant 0 : index
      %c0_7 = arith.constant 0 : index
      %7 = vector.load %arg3[%c0_4, %c0_5, %c0_6, %c0_7] : memref<1x32x8x8xbf16, #tpu.memory_space<vmem>>, vector<1x32x8x8xbf16>
      %8 = vector.shape_cast %7 : vector<1x32x8x8xbf16> to vector<32x8x8xbf16>
      %c0_8 = arith.constant 0 : index
      %c0_9 = arith.constant 0 : index
      %c0_10 = arith.constant 0 : index
      %9 = vector.load %arg2[%c0_8, %c0_9, %c0_10] : memref<32x8x8xbf16, #tpu.memory_space<vmem>>, vector<32x8x8xbf16>
      "tpu.trace_start"() <{level = 10 : i32, message = "hlm,hmb->hlb"}> : () -> ()
      %cst = arith.constant dense<0.000000e+00> : vector<32x8x8xf32>
      %10 = tpu.matmul %8, %9, %cst {dimension_numbers = #tpu.dot_dimension_numbers<[2], [1], [1], [2], [0, 0, 0, 1, 1, 2], [0], [0]>} : vector<32x8x8xbf16>, vector<32x8x8xbf16>, vector<32x8x8xf32> -> vector<32x8x8xf32>
      "tpu.trace_stop"() : () -> ()
      %11 = arith.addf %6, %10 : vector<32x8x8xf32>
      %c0_11 = arith.constant 0 : index
      %c0_12 = arith.constant 0 : index
      %c0_13 = arith.constant 0 : index
      %12 = vector.load %arg4[%c0_11, %c0_12, %c0_13] : memref<32x8x8xf32, #tpu.memory_space<vmem>>, vector<32x8x8xf32>
      tpu.vector_store %arg4[%c0_11, %c0_12, %c0_13], %11 {strides = array<i32>} : memref<32x8x8xf32, #tpu.memory_space<vmem>>, vector<32x8x8xf32>,
    } else {
    }
    return
  }
  func.func @transform_0(%arg0: i32, %arg1: i32) -> (i32, i32, i32) {
    %0 = arith.minsi %arg1, %arg0 : i32
    %c0_i32 = arith.constant 0 : i32
    %c0_i32_0 = arith.constant 0 : i32
    %c0_i32_1 = arith.constant 0 : i32
    return %c0_i32, %0, %c0_i32_0 : i32, i32, i32
  }
  func.func @transform_1(%arg0: i32, %arg1: i32) -> (i32, i32, i32, i32) {
    %0 = arith.subi %arg0, %arg1 : i32
    %c0_i32 = arith.constant 0 : i32
    %1 = arith.maxsi %0, %c0_i32 : i32
    %c0_i32_0 = arith.constant 0 : i32
    %c0_i32_1 = arith.constant 0 : i32
    %c0_i32_2 = arith.constant 0 : i32
    %c0_i32_3 = arith.constant 0 : i32
    return %1, %c0_i32_0, %c0_i32_1, %c0_i32_2 : i32, i32, i32, i32
  }
  func.func @transform_2(%arg0: i32, %arg1: i32) -> (i32, i32, i32) {
    %c0_i32 = arith.constant 0 : i32
    %c0_i32_0 = arith.constant 0 : i32
    %c0_i32_1 = arith.constant 0 : i32
    return %c0_i32, %arg0, %c0_i32_0 : i32, i32, i32
  }
}

</mosaic_0001>

<llo_original>
// kernel: tpu_custom_call.1
$region0: #{tpu_custom_call.1}
  #allocation0 [shape = 'u32[]', space=smem, size = 0x4, offset = 0x4, fixed_abs, tag = 'smem constant byte address 0x4 - core index']
  #allocation1 [shape = 'u32[144,128]{1,0:T(1,128)}', space=vmem, size = 0x12000, scoped, tag = 'internal scratch']
  %s0 = inlined_call_operand.vmem [shape: bf16[32,16,8], index: 0, kind: input, shape index: {}]
  %s1 = inlined_call_operand.vmem [shape: bf16[2,32,8,8], index: 1, kind: input, shape index: {}]
  %s2 = inlined_call_operand.vmem [shape: f32[32,16,8], index: 2, kind: output, shape index: {}]
  %s3 = sld [smem:[#allocation0]]
  $region124: #{tpu_custom_call.1} parent=0
    _
  %s5 = ssub.s32 1, %s3
  %s6 = scalar_select 0, %s5, %s3
  $region1: #{tpu_custom_call.1} parent=0
    #allocation2 [shape = 'u8[131072]{0}', space=vmem, size = 0x20000, scoped, tag = 'input window, operand 0']
    #allocation3 [shape = 'u8[262144]{0}', space=vmem, size = 0x40000, scoped, tag = 'output window, operand 0']
    loop: start=0, step=1, limit=6
    $region2: #{tpu_custom_call.1} parent=1 // loop_pre_header
      _
    $region3: #{tpu_custom_call.1} parent=1 // loop_header
      %s8 = sphi 0, %s12
      %p9 = scmp.ge.s32.totalorder %s8, 6
      %s15 = sphi 0, %s27
      %s16 = sphi 0, %s23
      %s17 = sphi 0, %s15
      %s18 = sphi 0, %s16
      %s19 = sphi 0, %s17
      %s20 = sphi 0, %s18
      %s34 = sphi 0, %s36
      %s37 = sphi 0, %s34
      %s38 = sphi 0, %s37
      %s54 = sphi 0, %s38
      %s66 = sphi 0, %s68
      %s69 = sphi 0, %s66
      %s70 = sphi 0, %s69
      %s86 = sphi 0, %s70
      %s92 = sphi 0, %s94
      %s95 = sphi 0, %s92
      %s96 = sphi 0, %s95
      %s112 = sphi 0, %s96
    $region4: #{tpu_custom_call.1} parent=1 // loop_header_branch
      %11 = sbr.rel (%p9) target = $region8
    $region5: #{tpu_custom_call.1} parent=1 // loop_body
      %s13 = ssub.s32 %s8, 1
      %s14 = ssub.s32 %s8, 2
      %s21 = sadd.s32 1, %s16
      %p22 = scmp.ge.s32.totalorder %s21, 2
      %s23 = scalar_select %p22, 0, %s21
      %s24 = sadd.s32 1, %s15
      %s25 = scalar_select %p22, %s24, %s15
      %p26 = scmp.ge.s32.totalorder %s25, 2
      %s27 = scalar_select %p26, 0, %s25
      %p28 = scmp.lt.s32.totalorder %s16, %s15
      %s29 = scalar_select %p28, %s16, %s15
      %p30 = scmp.lt.s32.totalorder %s23, %s27
      %s31 = scalar_select %p30, %s23, %s27
      %s32 = ssub.s32 %s29, %s31
      %p33 = scmp.eq.s32.totalorder %s32, 0
      %s35 = sadd.s32 %s34, 1
      %s36 = scalar_select %p33, %s34, %s35
      %p39 = pneg %p33
      %p40 = scmp.eq.s32.totalorder %s8, 3
      %p41 = por %p39, %p40
      %p42 = scmp.ne.s32.totalorder %s34, %s37
      %p43 = scmp.eq.s32.totalorder %s8, 0
      %p44 = por %p42, %p43
      %p45 = scmp.ne.s32.totalorder %s34, %s37
      %p46 = scmp.eq.s32.totalorder %s13, 3
      %p47 = por %p45, %p46
      %p48 = scmp.ne.s32.totalorder %s37, %s38
      %p49 = scmp.eq.s32.totalorder %s13, 0
      %p50 = por %p48, %p49
      %p51 = scmp.ne.s32.totalorder %s37, %s38
      %p52 = scmp.eq.s32.totalorder %s14, 3
      %p53 = por %p51, %p52
      %p55 = scmp.ne.s32.totalorder %s38, %s54
      %p56 = scmp.eq.s32.totalorder %s14, 0
      %p57 = por %p55, %p56
      %s58 = ssub.s32 %s15, %s16
      %p59 = scmp.gt.s32.totalorder %s58, 0
      %s60 = scalar_select %p59, %s58, 0
      %s61 = ssub.s32 %s27, %s23
      %p62 = scmp.gt.s32.totalorder %s61, 0
      %s63 = scalar_select %p62, %s61, 0
      %s64 = ssub.s32 %s60, %s63
      %p65 = scmp.eq.s32.totalorder %s64, 0
      %s67 = sadd.s32 %s66, 1
      %s68 = scalar_select %p65, %s66, %s67
      %p71 = pneg %p65
      %p72 = scmp.eq.s32.totalorder %s8, 3
      %p73 = por %p71, %p72
      %p74 = scmp.ne.s32.totalorder %s66, %s69
      %p75 = scmp.eq.s32.totalorder %s8, 0
      %p76 = por %p74, %p75
      %p77 = scmp.ne.s32.totalorder %s66, %s69
      %p78 = scmp.eq.s32.totalorder %s13, 3
      %p79 = por %p77, %p78
      %p80 = scmp.ne.s32.totalorder %s69, %s70
      %p81 = scmp.eq.s32.totalorder %s13, 0
      %p82 = por %p80, %p81
      %p83 = scmp.ne.s32.totalorder %s69, %s70
      %p84 = scmp.eq.s32.totalorder %s14, 3
      %p85 = por %p83, %p84
      %p87 = scmp.ne.s32.totalorder %s70, %s86
      %p88 = scmp.eq.s32.totalorder %s14, 0
      %p89 = por %p87, %p88
      %s90 = ssub.s32 %s15, %s27
      %p91 = scmp.eq.s32.totalorder %s90, 0
      %s93 = sadd.s32 %s92, 1
      %s94 = scalar_select %p91, %s92, %s93
      %p97 = pneg %p91
      %p98 = scmp.eq.s32.totalorder %s8, 3
      %p99 = por %p97, %p98
      %p100 = scmp.ne.s32.totalorder %s92, %s95
      %p101 = scmp.eq.s32.totalorder %s8, 0
      %p102 = por %p100, %p101
      %p103 = scmp.ne.s32.totalorder %s92, %s95
      %p104 = scmp.eq.s32.totalorder %s13, 3
      %p105 = por %p103, %p104
      %p106 = scmp.ne.s32.totalorder %s95, %s96
      %p107 = scmp.eq.s32.totalorder %s13, 0
      %p108 = por %p106, %p107
      %p109 = scmp.ne.s32.totalorder %s95, %s96
      %p110 = scmp.eq.s32.totalorder %s14, 3
      %p111 = por %p109, %p110
      %p113 = scmp.ne.s32.totalorder %s96, %s112
      %p114 = scmp.eq.s32.totalorder %s14, 0
      %p115 = por %p113, %p114
      %p116 = scmp.le.s32.totalorder 1, %s8
      %p117 = scmp.lt.s32.totalorder %s8, 5
      %p118 = pnand %p116, %p117
      %p119 = pneg %p118
      // Predicated region
      $region9: #{tpu_custom_call.1} parent=5 // pred_check
        _
      $region10: #{tpu_custom_call.1} parent=5 // pred_check_branch
        %121 = sbr.rel (%p118) target = $region12
      $region11: #{tpu_custom_call.1} parent=5 // pred_region
        %s122 = ssub.s32 %s8, 1
      $region12: #{tpu_custom_call.1} parent=5 // pred_fallthru
        _
      %p123 = scmp.lt.s32.totalorder %s8, 4
      // Predicated region
      $region13: #{tpu_custom_call.1} parent=5 // pred_check
        %p124 = pneg %p123
      $region14: #{tpu_custom_call.1} parent=5 // pred_check_branch
        %126 = sbr.rel (%p124) target = $region16
      $region15: #{tpu_custom_call.1} parent=5 // pred_region
        // Predicated region
        $region17: #{tpu_custom_call.1} parent=15 // pred_check
          %p127 = pneg %p44
        $region18: #{tpu_custom_call.1} parent=15 // pred_check_branch
          %129 = sbr.rel (%p127) target = $region20
        $region19: #{tpu_custom_call.1} parent=15 // pred_region
          %s130 = sand.u32 %s34, 1
          %s131 = sand.u32 %s34, 1
          %s132 = smul.addr %s131, 128
          %s133 = scalar_lea.vmem [#allocation2], %s132
          %p134 = scmp.lt.s32.totalorder %s16, %s15
          %s135 = scalar_select %p134, %s16, %s15
          %s136 = smul.addr %s135, 4
          %s137 = scalar_lea.vmem %s0, %s136
          // Predicated region
          $region21: #{tpu_custom_call.1} parent=19 // pred_check
            _
          $region22: #{tpu_custom_call.1} parent=19 // pred_check_branch
            %139 = sbr.rel (0) target = $region24
          $region23: #{tpu_custom_call.1} parent=19 // pred_region
            // Predicated region
            $region25: #{tpu_custom_call.1} parent=23 // pred_check
              _
            $region26: #{tpu_custom_call.1} parent=23 // pred_check_branch
              %141 = sbr.rel target = $region28
            $region27: #{tpu_custom_call.1} parent=23 // pred_region
              // Predicated region
              $region40: #{tpu_custom_call.1} parent=27 // pred_check
                _
              $region41: #{tpu_custom_call.1} parent=27 // pred_check_branch
                %218 = sbr.rel (0) target = $region43
              $region42: #{tpu_custom_call.1} parent=27 // pred_region
                loop: start=0, step=1, limit=1
                $region44: #{tpu_custom_call.1} parent=42 // loop_pre_header
                  _
                $region45: #{tpu_custom_call.1} parent=42 // loop_header
                  %s220 = sphi 0, %s224
                  %p221 = scmp.ge.s32.totalorder %s220, 1
                  %s225 = sphi %s137, %s137
                  %s226 = sphi %s133, %s133
                $region46: #{tpu_custom_call.1} parent=42 // loop_header_branch
                  %223 = sbr.rel (%p221) target = $region50
                $region47: #{tpu_custom_call.1} parent=42 // loop_body
                  _
                $region48: #{tpu_custom_call.1} parent=42 // loop_footer
                  %s224 = sadd.s32 1, %s220
                $region49: #{tpu_custom_call.1} parent=42 // loop_footer_branch
                  %219 = sbr.rel target = $region45
                $region50: #{tpu_custom_call.1} parent=42 // loop_exit
                  _
                loop: start=0, step=1, limit=1
                $region51: #{tpu_custom_call.1} parent=42 // loop_pre_header
                  _
                $region52: #{tpu_custom_call.1} parent=42 // loop_header
                  %s229 = sphi 0, %s233
                  %p230 = scmp.ge.s32.totalorder %s229, 1
                  %s234 = sphi %s137, %s137
                  %s235 = sphi %s133, %s133
                $region53: #{tpu_custom_call.1} parent=42 // loop_header_branch
                  %232 = sbr.rel (%p230) target = $region57
                $region54: #{tpu_custom_call.1} parent=42 // loop_body
                  %v236 = vld [vmem:[%s234] sm:$0xf]
                  %237 = vst [vmem:[%s235] sm:$0xf] %v236
                  %v238 = vld [vmem:[%s234 + $0x8] sm:$0xf]
                  %239 = vst [vmem:[%s235 + $0x4] sm:$0xf] %v238
                  %v240 = vld [vmem:[%s234 + $0x10] sm:$0xf]
                  %241 = vst [vmem:[%s235 + $0x8] sm:$0xf] %v240
                  %v242 = vld [vmem:[%s234 + $0x18] sm:$0xf]
                  %243 = vst [vmem:[%s235 + $0xc] sm:$0xf] %v242
                  %v244 = vld [vmem:[%s234 + $0x20] sm:$0xf]
                  %245 = vst [vmem:[%s235 + $0x10] sm:$0xf] %v244
                  %v246 = vld [vmem:[%s234 + $0x28] sm:$0xf]
                  %247 = vst [vmem:[%s235 + $0x14] sm:$0xf] %v246
                  %v248 = vld [vmem:[%s234 + $0x30] sm:$0xf]
                  %249 = vst [vmem:[%s235 + $0x18] sm:$0xf] %v248
                  %v250 = vld [vmem:[%s234 + $0x38] sm:$0xf]
                  %251 = vst [vmem:[%s235 + $0x1c] sm:$0xf] %v250
                  %v252 = vld [vmem:[%s234 + $0x40] sm:$0xf]
                  %253 = vst [vmem:[%s235 + $0x20] sm:$0xf] %v252
                  %v254 = vld [vmem:[%s234 + $0x48] sm:$0xf]
                  %255 = vst [vmem:[%s235 + $0x24] sm:$0xf] %v254
                  %v256 = vld [vmem:[%s234 + $0x50] sm:$0xf]
                  %257 = vst [vmem:[%s235 + $0x28] sm:$0xf] %v256
                  %v258 = vld [vmem:[%s234 + $0x58] sm:$0xf]
                  %259 = vst [vmem:[%s235 + $0x2c] sm:$0xf] %v258
                  %v260 = vld [vmem:[%s234 + $0x60] sm:$0xf]
                  %261 = vst [vmem:[%s235 + $0x30] sm:$0xf] %v260
                  %v262 = vld [vmem:[%s234 + $0x68] sm:$0xf]
                  %263 = vst [vmem:[%s235 + $0x34] sm:$0xf] %v262
                  %v264 = vld [vmem:[%s234 + $0x70] sm:$0xf]
                  %265 = vst [vmem:[%s235 + $0x38] sm:$0xf] %v264
                  %v266 = vld [vmem:[%s234 + $0x78] sm:$0xf]
                  %267 = vst [vmem:[%s235 + $0x3c] sm:$0xf] %v266
                  %v268 = vld [vmem:[%s234 + $0x80] sm:$0xf]
                  %269 = vst [vmem:[%s235 + $0x40] sm:$0xf] %v268
                  %v270 = vld [vmem:[%s234 + $0x88] sm:$0xf]
                  %271 = vst [vmem:[%s235 + $0x44] sm:$0xf] %v270
                  %v272 = vld [vmem:[%s234 + $0x90] sm:$0xf]
                  %273 = vst [vmem:[%s235 + $0x48] sm:$0xf] %v272
                  %v274 = vld [vmem:[%s234 + $0x98] sm:$0xf]
                  %275 = vst [vmem:[%s235 + $0x4c] sm:$0xf] %v274
                  %v276 = vld [vmem:[%s234 + $0xa0] sm:$0xf]
                  %277 = vst [vmem:[%s235 + $0x50] sm:$0xf] %v276
                  %v278 = vld [vmem:[%s234 + $0xa8] sm:$0xf]
                  %279 = vst [vmem:[%s235 + $0x54] sm:$0xf] %v278
                  %v280 = vld [vmem:[%s234 + $0xb0] sm:$0xf]
                  %281 = vst [vmem:[%s235 + $0x58] sm:$0xf] %v280
                  %v282 = vld [vmem:[%s234 + $0xb8] sm:$0xf]
                  %283 = vst [vmem:[%s235 + $0x5c] sm:$0xf] %v282
                  %v284 = vld [vmem:[%s234 + $0xc0] sm:$0xf]
                  %285 = vst [vmem:[%s235 + $0x60] sm:$0xf] %v284
                  %v286 = vld [vmem:[%s234 + $0xc8] sm:$0xf]
                  %287 = vst [vmem:[%s235 + $0x64] sm:$0xf] %v286
                  %v288 = vld [vmem:[%s234 + $0xd0] sm:$0xf]
                  %289 = vst [vmem:[%s235 + $0x68] sm:$0xf] %v288
                  %v290 = vld [vmem:[%s234 + $0xd8] sm:$0xf]
                  %291 = vst [vmem:[%s235 + $0x6c] sm:$0xf] %v290
                  %v292 = vld [vmem:[%s234 + $0xe0] sm:$0xf]
                  %293 = vst [vmem:[%s235 + $0x70] sm:$0xf] %v292
                  %v294 = vld [vmem:[%s234 + $0xe8] sm:$0xf]
                  %295 = vst [vmem:[%s235 + $0x74] sm:$0xf] %v294
                  %v296 = vld [vmem:[%s234 + $0xf0] sm:$0xf]
                  %297 = vst [vmem:[%s235 + $0x78] sm:$0xf] %v296
                  %v298 = vld [vmem:[%s234 + $0xf8] sm:$0xf]
                  %299 = vst [vmem:[%s235 + $0x7c] sm:$0xf] %v298
                $region55: #{tpu_custom_call.1} parent=42 // loop_footer
                  %s233 = sadd.s32 1, %s229
                $region56: #{tpu_custom_call.1} parent=42 // loop_footer_branch
                  %228 = sbr.rel target = $region52
                $region57: #{tpu_custom_call.1} parent=42 // loop_exit
                  _
              $region43: #{tpu_custom_call.1} parent=27 // pred_fallthru
                _
            $region28: #{tpu_custom_call.1} parent=23 // pred_fallthru
              _
            // Predicated region
            $region29: #{tpu_custom_call.1} parent=23 // pred_check
              _
            $region30: #{tpu_custom_call.1} parent=23 // pred_check_branch
              %143 = sbr.rel (0) target = $region32
            $region31: #{tpu_custom_call.1} parent=23 // pred_region
              loop: start=0, step=1, limit=1
              $region33: #{tpu_custom_call.1} parent=31 // loop_pre_header
                _
              $region34: #{tpu_custom_call.1} parent=31 // loop_header
                %s146 = sphi 0, %s150
                %p147 = scmp.ge.s32.totalorder %s146, 1
                %s151 = sphi %s137, %s137
                %s152 = sphi %s133, %s133
              $region35: #{tpu_custom_call.1} parent=31 // loop_header_branch
                %149 = sbr.rel (%p147) target = $region39
              $region36: #{tpu_custom_call.1} parent=31 // loop_body
                %v153 = vld [vmem:[%s151] sm:$0xf]
                %154 = vst [vmem:[%s152] sm:$0xf] %v153
                %v155 = vld [vmem:[%s151 + $0x8] sm:$0xf]
                %156 = vst [vmem:[%s152 + $0x4] sm:$0xf] %v155
                %v157 = vld [vmem:[%s151 + $0x10] sm:$0xf]
                %158 = vst [vmem:[%s152 + $0x8] sm:$0xf] %v157
                %v159 = vld [vmem:[%s151 + $0x18] sm:$0xf]
                %160 = vst [vmem:[%s152 + $0xc] sm:$0xf] %v159
                %v161 = vld [vmem:[%s151 + $0x20] sm:$0xf]
                %162 = vst [vmem:[%s152 + $0x10] sm:$0xf] %v161
                %v163 = vld [vmem:[%s151 + $0x28] sm:$0xf]
                %164 = vst [vmem:[%s152 + $0x14] sm:$0xf] %v163
                %v165 = vld [vmem:[%s151 + $0x30] sm:$0xf]
                %166 = vst [vmem:[%s152 + $0x18] sm:$0xf] %v165
                %v167 = vld [vmem:[%s151 + $0x38] sm:$0xf]
                %168 = vst [vmem:[%s152 + $0x1c] sm:$0xf] %v167
                %v169 = vld [vmem:[%s151 + $0x40] sm:$0xf]
                %170 = vst [vmem:[%s152 + $0x20] sm:$0xf] %v169
                %v171 = vld [vmem:[%s151 + $0x48] sm:$0xf]
                %172 = vst [vmem:[%s152 + $0x24] sm:$0xf] %v171
                %v173 = vld [vmem:[%s151 + $0x50] sm:$0xf]
                %174 = vst [vmem:[%s152 + $0x28] sm:$0xf] %v173
                %v175 = vld [vmem:[%s151 + $0x58] sm:$0xf]
                %176 = vst [vmem:[%s152 + $0x2c] sm:$0xf] %v175
                %v177 = vld [vmem:[%s151 + $0x60] sm:$0xf]
                %178 = vst [vmem:[%s152 + $0x30] sm:$0xf] %v177
                %v179 = vld [vmem:[%s151 + $0x68] sm:$0xf]
                %180 = vst [vmem:[%s152 + $0x34] sm:$0xf] %v179
                %v181 = vld [vmem:[%s151 + $0x70] sm:$0xf]
                %182 = vst [vmem:[%s152 + $0x38] sm:$0xf] %v181
                %v183 = vld [vmem:[%s151 + $0x78] sm:$0xf]
                %184 = vst [vmem:[%s152 + $0x3c] sm:$0xf] %v183
                %v185 = vld [vmem:[%s151 + $0x80] sm:$0xf]
                %186 = vst [vmem:[%s152 + $0x40] sm:$0xf] %v185
                %v187 = vld [vmem:[%s151 + $0x88] sm:$0xf]
                %188 = vst [vmem:[%s152 + $0x44] sm:$0xf] %v187
                %v189 = vld [vmem:[%s151 + $0x90] sm:$0xf]
                %190 = vst [vmem:[%s152 + $0x48] sm:$0xf] %v189
                %v191 = vld [vmem:[%s151 + $0x98] sm:$0xf]
                %192 = vst [vmem:[%s152 + $0x4c] sm:$0xf] %v191
                %v193 = vld [vmem:[%s151 + $0xa0] sm:$0xf]
                %194 = vst [vmem:[%s152 + $0x50] sm:$0xf] %v193
                %v195 = vld [vmem:[%s151 + $0xa8] sm:$0xf]
                %196 = vst [vmem:[%s152 + $0x54] sm:$0xf] %v195
                %v197 = vld [vmem:[%s151 + $0xb0] sm:$0xf]
                %198 = vst [vmem:[%s152 + $0x58] sm:$0xf] %v197
                %v199 = vld [vmem:[%s151 + $0xb8] sm:$0xf]
                %200 = vst [vmem:[%s152 + $0x5c] sm:$0xf] %v199
                %v201 = vld [vmem:[%s151 + $0xc0] sm:$0xf]
                %202 = vst [vmem:[%s152 + $0x60] sm:$0xf] %v201
                %v203 = vld [vmem:[%s151 + $0xc8] sm:$0xf]
                %204 = vst [vmem:[%s152 + $0x64] sm:$0xf] %v203
                %v205 = vld [vmem:[%s151 + $0xd0] sm:$0xf]
                %206 = vst [vmem:[%s152 + $0x68] sm:$0xf] %v205
                %v207 = vld [vmem:[%s151 + $0xd8] sm:$0xf]
                %208 = vst [vmem:[%s152 + $0x6c] sm:$0xf] %v207
                %v209 = vld [vmem:[%s151 + $0xe0] sm:$0xf]
                %210 = vst [vmem:[%s152 + $0x70] sm:$0xf] %v209
                %v211 = vld [vmem:[%s151 + $0xe8] sm:$0xf]
                %212 = vst [vmem:[%s152 + $0x74] sm:$0xf] %v211
                %v213 = vld [vmem:[%s151 + $0xf0] sm:$0xf]
                %214 = vst [vmem:[%s152 + $0x78] sm:$0xf] %v213
                %v215 = vld [vmem:[%s151 + $0xf8] sm:$0xf]
                %216 = vst [vmem:[%s152 + $0x7c] sm:$0xf] %v215
              $region37: #{tpu_custom_call.1} parent=31 // loop_footer
                %s150 = sadd.s32 1, %s146
              $region38: #{tpu_custom_call.1} parent=31 // loop_footer_branch
                %145 = sbr.rel target = $region34
              $region39: #{tpu_custom_call.1} parent=31 // loop_exit
                _
            $region32: #{tpu_custom_call.1} parent=23 // pred_fallthru
              _
          $region24: #{tpu_custom_call.1} parent=19 // pred_fallthru
            _
          %300 = vnop
        $region20: #{tpu_custom_call.1} parent=15 // pred_fallthru
          _
        // Predicated region
        $region58: #{tpu_custom_call.1} parent=15 // pred_check
          %p301 = pneg %p76
        $region59: #{tpu_custom_call.1} parent=15 // pred_check_branch
          %303 = sbr.rel (%p301) target = $region61
        $region60: #{tpu_custom_call.1} parent=15 // pred_region
          %s304 = ssub.s32 %s15, %s16
          %p305 = scmp.gt.s32.totalorder %s304, 0
          %s306 = scalar_select %p305, %s304, 0
          %p307 = scmp.lt.s32.totalorder %s306, 1
          %s308 = scalar_select %p307, %s306, 1
          %s309 = smul.addr %s308, 32
          %s310 = smul.addr %s309, 4
          %s311 = scalar_lea.vmem %s1, %s310
          %s312 = ssub.s32 %s15, %s16
          %p313 = scmp.gt.s32.totalorder %s312, 0
          %s314 = scalar_select %p313, %s312, 0
        $region61: #{tpu_custom_call.1} parent=15 // pred_fallthru
          _
      $region16: #{tpu_custom_call.1} parent=5 // pred_fallthru
        _
      %p315 = scmp.le.s32.totalorder 1, %s8
      %p316 = scmp.lt.s32.totalorder %s8, 5
      %p317 = pnand %p315, %p316
      %p318 = pneg %p317
      // Predicated region
      $region62: #{tpu_custom_call.1} parent=5 // pred_check
        _
      $region63: #{tpu_custom_call.1} parent=5 // pred_check_branch
        %320 = sbr.rel (%p317) target = $region65
      $region64: #{tpu_custom_call.1} parent=5 // pred_region
        %s321 = ssub.s32 %s8, 1
        %s322 = sand.u32 %s37, 1
        %s323 = sand.u32 %s37, 1
        %s324 = smul.addr %s323, 128
        %s325 = scalar_lea.vmem [#allocation2], %s324
        // Predicated region
        $region66: #{tpu_custom_call.1} parent=64 // pred_check
          %p326 = pneg %p50
        $region67: #{tpu_custom_call.1} parent=64 // pred_check_branch
          %328 = sbr.rel (%p326) target = $region69
        $region68: #{tpu_custom_call.1} parent=64 // pred_region
          _
        $region69: #{tpu_custom_call.1} parent=64 // pred_fallthru
          _
        %s329 = sand.u32 %s37, 1
        %s330 = sand.u32 %s37, 1
        %s331 = smul.addr %s330, 128
        %s332 = scalar_lea.vmem [#allocation2], %s331
        %p333 = pneg %p50
        %p334 = pneg %p47
        %s335 = ssub.s32 %s17, %s18
        %p336 = scmp.gt.s32.totalorder %s335, 0
        %s337 = scalar_select %p336, %s335, 0
        %p338 = scmp.lt.s32.totalorder %s337, 1
        %s339 = scalar_select %p338, %s337, 1
        %s340 = smul.addr %s339, 32
        %s341 = smul.addr %s340, 4
        %s342 = scalar_lea.vmem %s1, %s341
        %p343 = pneg %p82
        %p344 = pneg %p79
        %p345 = pneg %p108
        %p346 = pneg %p105
        %s347 = sand.u32 %s95, 1
        %s348 = sand.u32 %s95, 1
        %s349 = smul.addr %s348, 256
        %s350 = scalar_lea.vmem [#allocation3], %s349
        %p351 = scmp.lt.s32.totalorder %s18, %s17
        %s352 = scalar_select %p351, %s18, %s17
        %s353 = ssub.s32 %s17, %s18
        %p354 = scmp.gt.s32.totalorder %s353, 0
        %s355 = scalar_select %p354, %s353, 0
        %p356 = scmp.lt.s32.totalorder %s355, 1
        %s357 = scalar_select %p356, %s355, 1
        %s358 = smul.addr %s357, 32
        %s359 = smul.addr %s358, 4
        %s360 = scalar_lea.vmem %s1, %s359
        %s361 = ssub.s32 %s17, %s18
        %p362 = scmp.gt.s32.totalorder %s361, 0
        %s363 = scalar_select %p362, %s361, 0
        %p365 = scmp.eq.s32.totalorder %s18, 0
        // Predicated region
        $region70: #{tpu_custom_call.1} parent=64 // pred_check
          %p366 = pneg %p365
        $region71: #{tpu_custom_call.1} parent=64 // pred_check_branch
          %368 = sbr.rel (%p366) target = $region73
        $region72: #{tpu_custom_call.1} parent=64 // pred_region
          %vm369 = vcmask 64512
          %370 = vst.msk [vmem:[%s350] sm:$0xff] %vm369, 0.0
          %371 = vst.msk [vmem:[%s350 + $0x8] sm:$0xff] %vm369, 0.0
          %372 = vst.msk [vmem:[%s350 + $0x10] sm:$0xff] %vm369, 0.0
          %373 = vst.msk [vmem:[%s350 + $0x18] sm:$0xff] %vm369, 0.0
          %374 = vst.msk [vmem:[%s350 + $0x20] sm:$0xff] %vm369, 0.0
          %375 = vst.msk [vmem:[%s350 + $0x28] sm:$0xff] %vm369, 0.0
          %376 = vst.msk [vmem:[%s350 + $0x30] sm:$0xff] %vm369, 0.0
          %377 = vst.msk [vmem:[%s350 + $0x38] sm:$0xff] %vm369, 0.0
          %378 = vst.msk [vmem:[%s350 + $0x40] sm:$0xff] %vm369, 0.0
          %379 = vst.msk [vmem:[%s350 + $0x48] sm:$0xff] %vm369, 0.0
          %380 = vst.msk [vmem:[%s350 + $0x50] sm:$0xff] %vm369, 0.0
          %381 = vst.msk [vmem:[%s350 + $0x58] sm:$0xff] %vm369, 0.0
          %382 = vst.msk [vmem:[%s350 + $0x60] sm:$0xff] %vm369, 0.0
          %383 = vst.msk [vmem:[%s350 + $0x68] sm:$0xff] %vm369, 0.0
          %384 = vst.msk [vmem:[%s350 + $0x70] sm:$0xff] %vm369, 0.0
          %385 = vst.msk [vmem:[%s350 + $0x78] sm:$0xff] %vm369, 0.0
          %386 = vst.msk [vmem:[%s350 + $0x80] sm:$0xff] %vm369, 0.0
          %387 = vst.msk [vmem:[%s350 + $0x88] sm:$0xff] %vm369, 0.0
          %388 = vst.msk [vmem:[%s350 + $0x90] sm:$0xff] %vm369, 0.0
          %389 = vst.msk [vmem:[%s350 + $0x98] sm:$0xff] %vm369, 0.0
          %390 = vst.msk [vmem:[%s350 + $0xa0] sm:$0xff] %vm369, 0.0
          %391 = vst.msk [vmem:[%s350 + $0xa8] sm:$0xff] %vm369, 0.0
          %392 = vst.msk [vmem:[%s350 + $0xb0] sm:$0xff] %vm369, 0.0
          %393 = vst.msk [vmem:[%s350 + $0xb8] sm:$0xff] %vm369, 0.0
          %394 = vst.msk [vmem:[%s350 + $0xc0] sm:$0xff] %vm369, 0.0
          %395 = vst.msk [vmem:[%s350 + $0xc8] sm:$0xff] %vm369, 0.0
          %396 = vst.msk [vmem:[%s350 + $0xd0] sm:$0xff] %vm369, 0.0
          %397 = vst.msk [vmem:[%s350 + $0xd8] sm:$0xff] %vm369, 0.0
          %398 = vst.msk [vmem:[%s350 + $0xe0] sm:$0xff] %vm369, 0.0
          %399 = vst.msk [vmem:[%s350 + $0xe8] sm:$0xff] %vm369, 0.0
          %400 = vst.msk [vmem:[%s350 + $0xf0] sm:$0xff] %vm369, 0.0
          %401 = vst.msk [vmem:[%s350 + $0xf8] sm:$0xff] %vm369, 0.0
        $region73: #{tpu_custom_call.1} parent=64 // pred_fallthru
          _
        %p402 = scmp.le.s32.totalorder %s18, %s17
        // Predicated region
        $region74: #{tpu_custom_call.1} parent=64 // pred_check
          %p403 = pneg %p402
        $region75: #{tpu_custom_call.1} parent=64 // pred_check_branch
          %405 = sbr.rel (%p403) target = $region77
        $region76: #{tpu_custom_call.1} parent=64 // pred_region
          %v406 = vld [vmem:[%s350] sm:$0xff]
          %v407 = vld [vmem:[%s350 + $0x8] sm:$0xff]
          %v408 = vld [vmem:[%s350 + $0x10] sm:$0xff]
          %v409 = vld [vmem:[%s350 + $0x18] sm:$0xff]
          %v410 = vld [vmem:[%s350 + $0x20] sm:$0xff]
          %v411 = vld [vmem:[%s350 + $0x28] sm:$0xff]
          %v412 = vld [vmem:[%s350 + $0x30] sm:$0xff]
          %v413 = vld [vmem:[%s350 + $0x38] sm:$0xff]
          %v414 = vld [vmem:[%s350 + $0x40] sm:$0xff]
          %v415 = vld [vmem:[%s350 + $0x48] sm:$0xff]
          %v416 = vld [vmem:[%s350 + $0x50] sm:$0xff]
          %v417 = vld [vmem:[%s350 + $0x58] sm:$0xff]
          %v418 = vld [vmem:[%s350 + $0x60] sm:$0xff]
          %v419 = vld [vmem:[%s350 + $0x68] sm:$0xff]
          %v420 = vld [vmem:[%s350 + $0x70] sm:$0xff]
          %v421 = vld [vmem:[%s350 + $0x78] sm:$0xff]
          %v422 = vld [vmem:[%s350 + $0x80] sm:$0xff]
          %v423 = vld [vmem:[%s350 + $0x88] sm:$0xff]
          %v424 = vld [vmem:[%s350 + $0x90] sm:$0xff]
          %v425 = vld [vmem:[%s350 + $0x98] sm:$0xff]
          %v426 = vld [vmem:[%s350 + $0xa0] sm:$0xff]
          %v427 = vld [vmem:[%s350 + $0xa8] sm:$0xff]
          %v428 = vld [vmem:[%s350 + $0xb0] sm:$0xff]
          %v429 = vld [vmem:[%s350 + $0xb8] sm:$0xff]
          %v430 = vld [vmem:[%s350 + $0xc0] sm:$0xff]
          %v431 = vld [vmem:[%s350 + $0xc8] sm:$0xff]
          %v432 = vld [vmem:[%s350 + $0xd0] sm:$0xff]
          %v433 = vld [vmem:[%s350 + $0xd8] sm:$0xff]
          %v434 = vld [vmem:[%s350 + $0xe0] sm:$0xff]
          %v435 = vld [vmem:[%s350 + $0xe8] sm:$0xff]
          %v436 = vld [vmem:[%s350 + $0xf0] sm:$0xff]
          %v437 = vld [vmem:[%s350 + $0xf8] sm:$0xff]
          %v438 = vld [vmem:[%s360] sm:$0xf]
          %v439 = vld [vmem:[%s360 + $0x4] sm:$0xf]
          %v440 = vld [vmem:[%s360 + $0x8] sm:$0xf]
          %v441 = vld [vmem:[%s360 + $0xc] sm:$0xf]
          %v442 = vld [vmem:[%s360 + $0x10] sm:$0xf]
          %v443 = vld [vmem:[%s360 + $0x14] sm:$0xf]
          %v444 = vld [vmem:[%s360 + $0x18] sm:$0xf]
          %v445 = vld [vmem:[%s360 + $0x1c] sm:$0xf]
          %v446 = vld [vmem:[%s360 + $0x20] sm:$0xf]
          %v447 = vld [vmem:[%s360 + $0x24] sm:$0xf]
          %v448 = vld [vmem:[%s360 + $0x28] sm:$0xf]
          %v449 = vld [vmem:[%s360 + $0x2c] sm:$0xf]
          %v450 = vld [vmem:[%s360 + $0x30] sm:$0xf]
          %v451 = vld [vmem:[%s360 + $0x34] sm:$0xf]
          %v452 = vld [vmem:[%s360 + $0x38] sm:$0xf]
          %v453 = vld [vmem:[%s360 + $0x3c] sm:$0xf]
          %v454 = vld [vmem:[%s360 + $0x40] sm:$0xf]
          %v455 = vld [vmem:[%s360 + $0x44] sm:$0xf]
          %v456 = vld [vmem:[%s360 + $0x48] sm:$0xf]
          %v457 = vld [vmem:[%s360 + $0x4c] sm:$0xf]
          %v458 = vld [vmem:[%s360 + $0x50] sm:$0xf]
          %v459 = vld [vmem:[%s360 + $0x54] sm:$0xf]
          %v460 = vld [vmem:[%s360 + $0x58] sm:$0xf]
          %v461 = vld [vmem:[%s360 + $0x5c] sm:$0xf]
          %v462 = vld [vmem:[%s360 + $0x60] sm:$0xf]
          %v463 = vld [vmem:[%s360 + $0x64] sm:$0xf]
          %v464 = vld [vmem:[%s360 + $0x68] sm:$0xf]
          %v465 = vld [vmem:[%s360 + $0x6c] sm:$0xf]
          %v466 = vld [vmem:[%s360 + $0x70] sm:$0xf]
          %v467 = vld [vmem:[%s360 + $0x74] sm:$0xf]
          %v468 = vld [vmem:[%s360 + $0x78] sm:$0xf]
          %v469 = vld [vmem:[%s360 + $0x7c] sm:$0xf]
          %v470 = vld [vmem:[%s325] sm:$0xf]
          %v471 = vld [vmem:[%s325 + $0x4] sm:$0xf]
          %v472 = vld [vmem:[%s325 + $0x8] sm:$0xf]
          %v473 = vld [vmem:[%s325 + $0xc] sm:$0xf]
          %v474 = vld [vmem:[%s325 + $0x10] sm:$0xf]
          %v475 = vld [vmem:[%s325 + $0x14] sm:$0xf]
          %v476 = vld [vmem:[%s325 + $0x18] sm:$0xf]
          %v477 = vld [vmem:[%s325 + $0x1c] sm:$0xf]
          %v478 = vld [vmem:[%s325 + $0x20] sm:$0xf]
          %v479 = vld [vmem:[%s325 + $0x24] sm:$0xf]
          %v480 = vld [vmem:[%s325 + $0x28] sm:$0xf]
          %v481 = vld [vmem:[%s325 + $0x2c] sm:$0xf]
          %v482 = vld [vmem:[%s325 + $0x30] sm:$0xf]
          %v483 = vld [vmem:[%s325 + $0x34] sm:$0xf]
          %v484 = vld [vmem:[%s325 + $0x38] sm:$0xf]
          %v485 = vld [vmem:[%s325 + $0x3c] sm:$0xf]
          %v486 = vld [vmem:[%s325 + $0x40] sm:$0xf]
          %v487 = vld [vmem:[%s325 + $0x44] sm:$0xf]
          %v488 = vld [vmem:[%s325 + $0x48] sm:$0xf]
          %v489 = vld [vmem:[%s325 + $0x4c] sm:$0xf]
          %v490 = vld [vmem:[%s325 + $0x50] sm:$0xf]
          %v491 = vld [vmem:[%s325 + $0x54] sm:$0xf]
          %v492 = vld [vmem:[%s325 + $0x58] sm:$0xf]
          %v493 = vld [vmem:[%s325 + $0x5c] sm:$0xf]
          %v494 = vld [vmem:[%s325 + $0x60] sm:$0xf]
          %v495 = vld [vmem:[%s325 + $0x64] sm:$0xf]
          %v496 = vld [vmem:[%s325 + $0x68] sm:$0xf]
          %v497 = vld [vmem:[%s325 + $0x6c] sm:$0xf]
          %v498 = vld [vmem:[%s325 + $0x70] sm:$0xf]
          %v499 = vld [vmem:[%s325 + $0x74] sm:$0xf]
          %v500 = vld [vmem:[%s325 + $0x78] sm:$0xf]
          %v501 = vld [vmem:[%s325 + $0x7c] sm:$0xf]
          %vm502 = vcmask 64512
          %v504 = vsel %vm502, %v438, 0
          %vm506 = vcmask 1043456
          %v508 = vsel %vm506, %v470, 0
          %510 = vmatprep.subr.bf16.mxu0 0
          %511 = vmatpush1.bf16.msra.mxu0 %v508
          %512 = vmatprep.subr.bf16.mxu0 0
          %513 = vmatpush1.bf16.msra.mxu0 0
          %514 = vmatprep.subr.bf16.mxu0 0
          %515 = vmatpush1.bf16.msra.mxu0 0
          %516 = vmatprep.subr.bf16.mxu0 0
          %517 = vmatpush1.bf16.msra.mxu0 0
          %518 = vmatprep.subr.bf16.mxu0 0
          %519 = vmatpush1.bf16.msra.mxu0 0
          %520 = vmatprep.subr.bf16.mxu0 0
          %521 = vmatpush1.bf16.msra.mxu0 0
          %522 = vmatprep.subr.bf16.mxu0 0
          %523 = vmatpush1.bf16.msra.mxu0 0
          %524 = vmatprep.subr.bf16.mxu0 0
          %525 = vmatpush1.bf16.msra.mxu0 0
          %526 = vmatprep.subr.bf16.mxu0 0
          %527 = vmatpush1.bf16.msra.mxu0 0
          %528 = vmatprep.subr.bf16.mxu0 0
          %529 = vmatpush1.bf16.msra.mxu0 0
          %530 = vmatprep.subr.bf16.mxu0 0
          %531 = vmatpush1.bf16.msra.mxu0 0
          %532 = vmatprep.subr.bf16.mxu0 0
          %533 = vmatpush1.bf16.msra.mxu0 0
          %534 = vmatprep.subr.bf16.mxu0 0
          %535 = vmatpush1.bf16.msra.mxu0 0
          %536 = vmatprep.subr.bf16.mxu0 0
          %537 = vmatpush1.bf16.msra.mxu0 0
          %538 = vmatprep.subr.bf16.mxu0 0
          %539 = vmatpush1.bf16.msra.mxu0 0
          %540 = vmatprep.subr.bf16.mxu0 0
          %541 = vmatpush1.bf16.msra.mxu0 0
          %542 = vmatprep.mubr.bf16.mxu0 0
          %543 = vmatmul.mubr.bf16.gmra.mrb[0].mxu0 %v504
          %v544 = vpop.f32.mrb[0].mxu0
          %v545 = vadd.f32 0.0, %v544
          %v546 = vpop.f32.mrb[0].mxu0
          %v547 = vpop.f32.mrb[0].mxu0
          %v548 = vpop.f32.mrb[0].mxu0
          %549 = vdwg.mxu0
          %v551 = vsel %vm502, %v439, 0
          %v554 = vsel %vm506, %v471, 0
          %556 = vmatprep.subr.bf16.mxu0 0
          %557 = vmatpush1.bf16.msra.mxu0 %v554
          %558 = vmatprep.subr.bf16.mxu0 0
          %559 = vmatpush1.bf16.msra.mxu0 0
          %560 = vmatprep.subr.bf16.mxu0 0
          %561 = vmatpush1.bf16.msra.mxu0 0
          %562 = vmatprep.subr.bf16.mxu0 0
          %563 = vmatpush1.bf16.msra.mxu0 0
          %564 = vmatprep.subr.bf16.mxu0 0
          %565 = vmatpush1.bf16.msra.mxu0 0
          %566 = vmatprep.subr.bf16.mxu0 0
          %567 = vmatpush1.bf16.msra.mxu0 0
          %568 = vmatprep.subr.bf16.mxu0 0
          %569 = vmatpush1.bf16.msra.mxu0 0
          %570 = vmatprep.subr.bf16.mxu0 0
          %571 = vmatpush1.bf16.msra.mxu0 0
          %572 = vmatprep.subr.bf16.mxu0 0
          %573 = vmatpush1.bf16.msra.mxu0 0
          %574 = vmatprep.subr.bf16.mxu0 0
          %575 = vmatpush1.bf16.msra.mxu0 0
          %576 = vmatprep.subr.bf16.mxu0 0
          %577 = vmatpush1.bf16.msra.mxu0 0
          %578 = vmatprep.subr.bf16.mxu0 0
          %579 = vmatpush1.bf16.msra.mxu0 0
          %580 = vmatprep.subr.bf16.mxu0 0
          %581 = vmatpush1.bf16.msra.mxu0 0
          %582 = vmatprep.subr.bf16.mxu0 0
          %583 = vmatpush1.bf16.msra.mxu0 0
          %584 = vmatprep.subr.bf16.mxu0 0
          %585 = vmatpush1.bf16.msra.mxu0 0
          %586 = vmatprep.subr.bf16.mxu0 0
          %587 = vmatpush1.bf16.msra.mxu0 0
          %588 = vmatprep.mubr.bf16.mxu0 0
          %589 = vmatmul.mubr.bf16.gmra.mrb[0].mxu0 %v551
          %v590 = vpop.f32.mrb[0].mxu0
          %v591 = vadd.f32 0.0, %v590
          %v592 = vpop.f32.mrb[0].mxu0
          %v593 = vpop.f32.mrb[0].mxu0
          %v594 = vpop.f32.mrb[0].mxu0
          %595 = vdwg.mxu0
          %v597 = vsel %vm502, %v440, 0
          %v600 = vsel %vm506, %v472, 0
          %602 = vmatprep.subr.bf16.mxu0 0
          %603 = vmatpush1.bf16.msra.mxu0 %v600
          %604 = vmatprep.subr.bf16.mxu0 0
          %605 = vmatpush1.bf16.msra.mxu0 0
          %606 = vmatprep.subr.bf16.mxu0 0
          %607 = vmatpush1.bf16.msra.mxu0 0
          %608 = vmatprep.subr.bf16.mxu0 0
          %609 = vmatpush1.bf16.msra.mxu0 0
          %610 = vmatprep.subr.bf16.mxu0 0
          %611 = vmatpush1.bf16.msra.mxu0 0
          %612 = vmatprep.subr.bf16.mxu0 0
          %613 = vmatpush1.bf16.msra.mxu0 0
          %614 = vmatprep.subr.bf16.mxu0 0
          %615 = vmatpush1.bf16.msra.mxu0 0
          %616 = vmatprep.subr.bf16.mxu0 0
          %617 = vmatpush1.bf16.msra.mxu0 0
          %618 = vmatprep.subr.bf16.mxu0 0
          %619 = vmatpush1.bf16.msra.mxu0 0
          %620 = vmatprep.subr.bf16.mxu0 0
          %621 = vmatpush1.bf16.msra.mxu0 0
          %622 = vmatprep.subr.bf16.mxu0 0
          %623 = vmatpush1.bf16.msra.mxu0 0
          %624 = vmatprep.subr.bf16.mxu0 0
          %625 = vmatpush1.bf16.msra.mxu0 0
          %626 = vmatprep.subr.bf16.mxu0 0
          %627 = vmatpush1.bf16.msra.mxu0 0
          %628 = vmatprep.subr.bf16.mxu0 0
          %629 = vmatpush1.bf16.msra.mxu0 0
          %630 = vmatprep.subr.bf16.mxu0 0
          %631 = vmatpush1.bf16.msra.mxu0 0
          %632 = vmatprep.subr.bf16.mxu0 0
          %633 = vmatpush1.bf16.msra.mxu0 0
          %634 = vmatprep.mubr.bf16.mxu0 0
          %635 = vmatmul.mubr.bf16.gmra.mrb[0].mxu0 %v597
          %v636 = vpop.f32.mrb[0].mxu0
          %v637 = vadd.f32 0.0, %v636
          %v638 = vpop.f32.mrb[0].mxu0
          %v639 = vpop.f32.mrb[0].mxu0
          %v640 = vpop.f32.mrb[0].mxu0
          %641 = vdwg.mxu0
          %v643 = vsel %vm502, %v441, 0
          %v646 = vsel %vm506, %v473, 0
          %648 = vmatprep.subr.bf16.mxu0 0
          %649 = vmatpush1.bf16.msra.mxu0 %v646
          %650 = vmatprep.subr.bf16.mxu0 0
          %651 = vmatpush1.bf16.msra.mxu0 0
          %652 = vmatprep.subr.bf16.mxu0 0
          %653 = vmatpush1.bf16.msra.mxu0 0
          %654 = vmatprep.subr.bf16.mxu0 0
          %655 = vmatpush1.bf16.msra.mxu0 0
          %656 = vmatprep.subr.bf16.mxu0 0
          %657 = vmatpush1.bf16.msra.mxu0 0
          %658 = vmatprep.subr.bf16.mxu0 0
          %659 = vmatpush1.bf16.msra.mxu0 0
          %660 = vmatprep.subr.bf16.mxu0 0
          %661 = vmatpush1.bf16.msra.mxu0 0
          %662 = vmatprep.subr.bf16.mxu0 0
          %663 = vmatpush1.bf16.msra.mxu0 0
          %664 = vmatprep.subr.bf16.mxu0 0
          %665 = vmatpush1.bf16.msra.mxu0 0
          %666 = vmatprep.subr.bf16.mxu0 0
          %667 = vmatpush1.bf16.msra.mxu0 0
          %668 = vmatprep.subr.bf16.mxu0 0
          %669 = vmatpush1.bf16.msra.mxu0 0
          %670 = vmatprep.subr.bf16.mxu0 0
          %671 = vmatpush1.bf16.msra.mxu0 0
          %672 = vmatprep.subr.bf16.mxu0 0
          %673 = vmatpush1.bf16.msra.mxu0 0
          %674 = vmatprep.subr.bf16.mxu0 0
          %675 = vmatpush1.bf16.msra.mxu0 0
          %676 = vmatprep.subr.bf16.mxu0 0
          %677 = vmatpush1.bf16.msra.mxu0 0
          %678 = vmatprep.subr.bf16.mxu0 0
          %679 = vmatpush1.bf16.msra.mxu0 0
          %680 = vmatprep.mubr.bf16.mxu0 0
          %681 = vmatmul.mubr.bf16.gmra.mrb[0].mxu0 %v643
          %v682 = vpop.f32.mrb[0].mxu0
          %v683 = vadd.f32 0.0, %v682
          %v684 = vpop.f32.mrb[0].mxu0
          %v685 = vpop.f32.mrb[0].mxu0
          %v686 = vpop.f32.mrb[0].mxu0
          %687 = vdwg.mxu0
          %v689 = vsel %vm502, %v442, 0
          %v692 = vsel %vm506, %v474, 0
          %694 = vmatprep.subr.bf16.mxu0 0
          %695 = vmatpush1.bf16.msra.mxu0 %v692
          %696 = vmatprep.subr.bf16.mxu0 0
          %697 = vmatpush1.bf16.msra.mxu0 0
          %698 = vmatprep.subr.bf16.mxu0 0
          %699 = vmatpush1.bf16.msra.mxu0 0
          %700 = vmatprep.subr.bf16.mxu0 0
          %701 = vmatpush1.bf16.msra.mxu0 0
          %702 = vmatprep.subr.bf16.mxu0 0
          %703 = vmatpush1.bf16.msra.mxu0 0
          %704 = vmatprep.subr.bf16.mxu0 0
          %705 = vmatpush1.bf16.msra.mxu0 0
          %706 = vmatprep.subr.bf16.mxu0 0
          %707 = vmatpush1.bf16.msra.mxu0 0
          %708 = vmatprep.subr.bf16.mxu0 0
          %709 = vmatpush1.bf16.msra.mxu0 0
          %710 = vmatprep.subr.bf16.mxu0 0
          %711 = vmatpush1.bf16.msra.mxu0 0
          %712 = vmatprep.subr.bf16.mxu0 0
          %713 = vmatpush1.bf16.msra.mxu0 0
          %714 = vmatprep.subr.bf16.mxu0 0
          %715 = vmatpush1.bf16.msra.mxu0 0
          %716 = vmatprep.subr.bf16.mxu0 0
          %717 = vmatpush1.bf16.msra.mxu0 0
          %718 = vmatprep.subr.bf16.mxu0 0
          %719 = vmatpush1.bf16.msra.mxu0 0
          %720 = vmatprep.subr.bf16.mxu0 0
          %721 = vmatpush1.bf16.msra.mxu0 0
          %722 = vmatprep.subr.bf16.mxu0 0
          %723 = vmatpush1.bf16.msra.mxu0 0
          %724 = vmatprep.subr.bf16.mxu0 0
          %725 = vmatpush1.bf16.msra.mxu0 0
          %726 = vmatprep.mubr.bf16.mxu0 0
          %727 = vmatmul.mubr.bf16.gmra.mrb[0].mxu0 %v689
          %v728 = vpop.f32.mrb[0].mxu0
          %v729 = vadd.f32 0.0, %v728
          %v730 = vpop.f32.mrb[0].mxu0
          %v731 = vpop.f32.mrb[0].mxu0
          %v732 = vpop.f32.mrb[0].mxu0
          %733 = vdwg.mxu0
          %v735 = vsel %vm502, %v443, 0
          %v738 = vsel %vm506, %v475, 0
          %740 = vmatprep.subr.bf16.mxu0 0
          %741 = vmatpush1.bf16.msra.mxu0 %v738
          %742 = vmatprep.subr.bf16.mxu0 0
          %743 = vmatpush1.bf16.msra.mxu0 0
          %744 = vmatprep.subr.bf16.mxu0 0
          %745 = vmatpush1.bf16.msra.mxu0 0
          %746 = vmatprep.subr.bf16.mxu0 0
          %747 = vmatpush1.bf16.msra.mxu0 0
          %748 = vmatprep.subr.bf16.mxu0 0
          %749 = vmatpush1.bf16.msra.mxu0 0
          %750 = vmatprep.subr.bf16.mxu0 0
          %751 = vmatpush1.bf16.msra.mxu0 0
          %752 = vmatprep.subr.bf16.mxu0 0
          %753 = vmatpush1.bf16.msra.mxu0 0
          %754 = vmatprep.subr.bf16.mxu0 0
          %755 = vmatpush1.bf16.msra.mxu0 0
          %756 = vmatprep.subr.bf16.mxu0 0
          %757 = vmatpush1.bf16.msra.mxu0 0
          %758 = vmatprep.subr.bf16.mxu0 0
          %759 = vmatpush1.bf16.msra.mxu0 0
          %760 = vmatprep.subr.bf16.mxu0 0
          %761 = vmatpush1.bf16.msra.mxu0 0
          %762 = vmatprep.subr.bf16.mxu0 0
          %763 = vmatpush1.bf16.msra.mxu0 0
          %764 = vmatprep.subr.bf16.mxu0 0
          %765 = vmatpush1.bf16.msra.mxu0 0
          %766 = vmatprep.subr.bf16.mxu0 0
          %767 = vmatpush1.bf16.msra.mxu0 0
          %768 = vmatprep.subr.bf16.mxu0 0
          %769 = vmatpush1.bf16.msra.mxu0 0
          %770 = vmatprep.subr.bf16.mxu0 0
          %771 = vmatpush1.bf16.msra.mxu0 0
          %772 = vmatprep.mubr.bf16.mxu0 0
          %773 = vmatmul.mubr.bf16.gmra.mrb[0].mxu0 %v735
          %v774 = vpop.f32.mrb[0].mxu0
          %v775 = vadd.f32 0.0, %v774
          %v776 = vpop.f32.mrb[0].mxu0
          %v777 = vpop.f32.mrb[0].mxu0
          %v778 = vpop.f32.mrb[0].mxu0
          %779 = vdwg.mxu0
          %v781 = vsel %vm502, %v444, 0
          %v784 = vsel %vm506, %v476, 0
          %786 = vmatprep.subr.bf16.mxu0 0
          %787 = vmatpush1.bf16.msra.mxu0 %v784
          %788 = vmatprep.subr.bf16.mxu0 0
          %789 = vmatpush1.bf16.msra.mxu0 0
          %790 = vmatprep.subr.bf16.mxu0 0
          %791 = vmatpush1.bf16.msra.mxu0 0
          %792 = vmatprep.subr.bf16.mxu0 0
          %793 = vmatpush1.bf16.msra.mxu0 0
          %794 = vmatprep.subr.bf16.mxu0 0
          %795 = vmatpush1.bf16.msra.mxu0 0
          %796 = vmatprep.subr.bf16.mxu0 0
          %797 = vmatpush1.bf16.msra.mxu0 0
          %798 = vmatprep.subr.bf16.mxu0 0
          %799 = vmatpush1.bf16.msra.mxu0 0
          %800 = vmatprep.subr.bf16.mxu0 0
          %801 = vmatpush1.bf16.msra.mxu0 0
          %802 = vmatprep.subr.bf16.mxu0 0
          %803 = vmatpush1.bf16.msra.mxu0 0
          %804 = vmatprep.subr.bf16.mxu0 0
          %805 = vmatpush1.bf16.msra.mxu0 0
          %806 = vmatprep.subr.bf16.mxu0 0
          %807 = vmatpush1.bf16.msra.mxu0 0
          %808 = vmatprep.subr.bf16.mxu0 0
          %809 = vmatpush1.bf16.msra.mxu0 0
          %810 = vmatprep.subr.bf16.mxu0 0
          %811 = vmatpush1.bf16.msra.mxu0 0
          %812 = vmatprep.subr.bf16.mxu0 0
          %813 = vmatpush1.bf16.msra.mxu0 0
          %814 = vmatprep.subr.bf16.mxu0 0
          %815 = vmatpush1.bf16.msra.mxu0 0
          %816 = vmatprep.subr.bf16.mxu0 0
          %817 = vmatpush1.bf16.msra.mxu0 0
          %818 = vmatprep.mubr.bf16.mxu0 0
          %819 = vmatmul.mubr.bf16.gmra.mrb[0].mxu0 %v781
          %v820 = vpop.f32.mrb[0].mxu0
          %v821 = vadd.f32 0.0, %v820
          %v822 = vpop.f32.mrb[0].mxu0
          %v823 = vpop.f32.mrb[0].mxu0
          %v824 = vpop.f32.mrb[0].mxu0
          %825 = vdwg.mxu0
          %v827 = vsel %vm502, %v445, 0
          %v830 = vsel %vm506, %v477, 0
          %832 = vmatprep.subr.bf16.mxu0 0
          %833 = vmatpush1.bf16.msra.mxu0 %v830
          %834 = vmatprep.subr.bf16.mxu0 0
          %835 = vmatpush1.bf16.msra.mxu0 0
          %836 = vmatprep.subr.bf16.mxu0 0
          %837 = vmatpush1.bf16.msra.mxu0 0
          %838 = vmatprep.subr.bf16.mxu0 0
          %839 = vmatpush1.bf16.msra.mxu0 0
          %840 = vmatprep.subr.bf16.mxu0 0
          %841 = vmatpush1.bf16.msra.mxu0 0
          %842 = vmatprep.subr.bf16.mxu0 0
          %843 = vmatpush1.bf16.msra.mxu0 0
          %844 = vmatprep.subr.bf16.mxu0 0
          %845 = vmatpush1.bf16.msra.mxu0 0
          %846 = vmatprep.subr.bf16.mxu0 0
          %847 = vmatpush1.bf16.msra.mxu0 0
          %848 = vmatprep.subr.bf16.mxu0 0
          %849 = vmatpush1.bf16.msra.mxu0 0
          %850 = vmatprep.subr.bf16.mxu0 0
          %851 = vmatpush1.bf16.msra.mxu0 0
          %852 = vmatprep.subr.bf16.mxu0 0
          %853 = vmatpush1.bf16.msra.mxu0 0
          %854 = vmatprep.subr.bf16.mxu0 0
          %855 = vmatpush1.bf16.msra.mxu0 0
          %856 = vmatprep.subr.bf16.mxu0 0
          %857 = vmatpush1.bf16.msra.mxu0 0
          %858 = vmatprep.subr.bf16.mxu0 0
          %859 = vmatpush1.bf16.msra.mxu0 0
          %860 = vmatprep.subr.bf16.mxu0 0
          %861 = vmatpush1.bf16.msra.mxu0 0
          %862 = vmatprep.subr.bf16.mxu0 0
          %863 = vmatpush1.bf16.msra.mxu0 0
          %864 = vmatprep.mubr.bf16.mxu0 0
          %865 = vmatmul.mubr.bf16.gmra.mrb[0].mxu0 %v827
          %v866 = vpop.f32.mrb[0].mxu0
          %v867 = vadd.f32 0.0, %v866
          %v868 = vpop.f32.mrb[0].mxu0
          %v869 = vpop.f32.mrb[0].mxu0
          %v870 = vpop.f32.mrb[0].mxu0
          %871 = vdwg.mxu0
          %v873 = vsel %vm502, %v446, 0
          %v876 = vsel %vm506, %v478, 0
          %878 = vmatprep.subr.bf16.mxu0 0
          %879 = vmatpush1.bf16.msra.mxu0 %v876
          %880 = vmatprep.subr.bf16.mxu0 0
          %881 = vmatpush1.bf16.msra.mxu0 0
          %882 = vmatprep.subr.bf16.mxu0 0
          %883 = vmatpush1.bf16.msra.mxu0 0
          %884 = vmatprep.subr.bf16.mxu0 0
          %885 = vmatpush1.bf16.msra.mxu0 0
          %886 = vmatprep.subr.bf16.mxu0 0
          %887 = vmatpush1.bf16.msra.mxu0 0
          %888 = vmatprep.subr.bf16.mxu0 0
          %889 = vmatpush1.bf16.msra.mxu0 0
          %890 = vmatprep.subr.bf16.mxu0 0
          %891 = vmatpush1.bf16.msra.mxu0 0
          %892 = vmatprep.subr.bf16.mxu0 0
          %893 = vmatpush1.bf16.msra.mxu0 0
          %894 = vmatprep.subr.bf16.mxu0 0
          %895 = vmatpush1.bf16.msra.mxu0 0
          %896 = vmatprep.subr.bf16.mxu0 0
          %897 = vmatpush1.bf16.msra.mxu0 0
          %898 = vmatprep.subr.bf16.mxu0 0
          %899 = vmatpush1.bf16.msra.mxu0 0
          %900 = vmatprep.subr.bf16.mxu0 0
          %901 = vmatpush1.bf16.msra.mxu0 0
          %902 = vmatprep.subr.bf16.mxu0 0
          %903 = vmatpush1.bf16.msra.mxu0 0
          %904 = vmatprep.subr.bf16.mxu0 0
          %905 = vmatpush1.bf16.msra.mxu0 0
          %906 = vmatprep.subr.bf16.mxu0 0
          %907 = vmatpush1.bf16.msra.mxu0 0
          %908 = vmatprep.subr.bf16.mxu0 0
          %909 = vmatpush1.bf16.msra.mxu0 0
          %910 = vmatprep.mubr.bf16.mxu0 0
          %911 = vmatmul.mubr.bf16.gmra.mrb[0].mxu0 %v873
          %v912 = vpop.f32.mrb[0].mxu0
          %v913 = vadd.f32 0.0, %v912
          %v914 = vpop.f32.mrb[0].mxu0
          %v915 = vpop.f32.mrb[0].mxu0
          %v916 = vpop.f32.mrb[0].mxu0
          %917 = vdwg.mxu0
          %v919 = vsel %vm502, %v447, 0
          %v922 = vsel %vm506, %v479, 0
          %924 = vmatprep.subr.bf16.mxu0 0
          %925 = vmatpush1.bf16.msra.mxu0 %v922
          %926 = vmatprep.subr.bf16.mxu0 0
          %927 = vmatpush1.bf16.msra.mxu0 0
          %928 = vmatprep.subr.bf16.mxu0 0
          %929 = vmatpush1.bf16.msra.mxu0 0
          %930 = vmatprep.subr.bf16.mxu0 0
          %931 = vmatpush1.bf16.msra.mxu0 0
          %932 = vmatprep.subr.bf16.mxu0 0
          %933 = vmatpush1.bf16.msra.mxu0 0
          %934 = vmatprep.subr.bf16.mxu0 0
          %935 = vmatpush1.bf16.msra.mxu0 0
          %936 = vmatprep.subr.bf16.mxu0 0
          %937 = vmatpush1.bf16.msra.mxu0 0
          %938 = vmatprep.subr.bf16.mxu0 0
          %939 = vmatpush1.bf16.msra.mxu0 0
          %940 = vmatprep.subr.bf16.mxu0 0
          %941 = vmatpush1.bf16.msra.mxu0 0
          %942 = vmatprep.subr.bf16.mxu0 0
          %943 = vmatpush1.bf16.msra.mxu0 0
          %944 = vmatprep.subr.bf16.mxu0 0
          %945 = vmatpush1.bf16.msra.mxu0 0
          %946 = vmatprep.subr.bf16.mxu0 0
          %947 = vmatpush1.bf16.msra.mxu0 0
          %948 = vmatprep.subr.bf16.mxu0 0
          %949 = vmatpush1.bf16.msra.mxu0 0
          %950 = vmatprep.subr.bf16.mxu0 0
          %951 = vmatpush1.bf16.msra.mxu0 0
          %952 = vmatprep.subr.bf16.mxu0 0
          %953 = vmatpush1.bf16.msra.mxu0 0
          %954 = vmatprep.subr.bf16.mxu0 0
          %955 = vmatpush1.bf16.msra.mxu0 0
          %956 = vmatprep.mubr.bf16.mxu0 0
          %957 = vmatmul.mubr.bf16.gmra.mrb[0].mxu0 %v919
          %v958 = vpop.f32.mrb[0].mxu0
          %v959 = vadd.f32 0.0, %v958
          %v960 = vpop.f32.mrb[0].mxu0
          %v961 = vpop.f32.mrb[0].mxu0
          %v962 = vpop.f32.mrb[0].mxu0
          %963 = vdwg.mxu0
          %v965 = vsel %vm502, %v448, 0
          %v968 = vsel %vm506, %v480, 0
          %970 = vmatprep.subr.bf16.mxu0 0
          %971 = vmatpush1.bf16.msra.mxu0 %v968
          %972 = vmatprep.subr.bf16.mxu0 0
          %973 = vmatpush1.bf16.msra.mxu0 0
          %974 = vmatprep.subr.bf16.mxu0 0
          %975 = vmatpush1.bf16.msra.mxu0 0
          %976 = vmatprep.subr.bf16.mxu0 0
          %977 = vmatpush1.bf16.msra.mxu0 0
          %978 = vmatprep.subr.bf16.mxu0 0
          %979 = vmatpush1.bf16.msra.mxu0 0
          %980 = vmatprep.subr.bf16.mxu0 0
          %981 = vmatpush1.bf16.msra.mxu0 0
          %982 = vmatprep.subr.bf16.mxu0 0
          %983 = vmatpush1.bf16.msra.mxu0 0
          %984 = vmatprep.subr.bf16.mxu0 0
          %985 = vmatpush1.bf16.msra.mxu0 0
          %986 = vmatprep.subr.bf16.mxu0 0
          %987 = vmatpush1.bf16.msra.mxu0 0
          %988 = vmatprep.subr.bf16.mxu0 0
          %989 = vmatpush1.bf16.msra.mxu0 0
          %990 = vmatprep.subr.bf16.mxu0 0
          %991 = vmatpush1.bf16.msra.mxu0 0
          %992 = vmatprep.subr.bf16.mxu0 0
          %993 = vmatpush1.bf16.msra.mxu0 0
          %994 = vmatprep.subr.bf16.mxu0 0
          %995 = vmatpush1.bf16.msra.mxu0 0
          %996 = vmatprep.subr.bf16.mxu0 0
          %997 = vmatpush1.bf16.msra.mxu0 0
          %998 = vmatprep.subr.bf16.mxu0 0
          %999 = vmatpush1.bf16.msra.mxu0 0
          %1000 = vmatprep.subr.bf16.mxu0 0
          %1001 = vmatpush1.bf16.msra.mxu0 0
          %1002 = vmatprep.mubr.bf16.mxu0 0
          %1003 = vmatmul.mubr.bf16.gmra.mrb[0].mxu0 %v965
          %v1004 = vpop.f32.mrb[0].mxu0
          %v1005 = vadd.f32 0.0, %v1004
          %v1006 = vpop.f32.mrb[0].mxu0
          %v1007 = vpop.f32.mrb[0].mxu0
          %v1008 = vpop.f32.mrb[0].mxu0
          %1009 = vdwg.mxu0
          %v1011 = vsel %vm502, %v449, 0
          %v1014 = vsel %vm506, %v481, 0
          %1016 = vmatprep.subr.bf16.mxu0 0
          %1017 = vmatpush1.bf16.msra.mxu0 %v1014
          %1018 = vmatprep.subr.bf16.mxu0 0
          %1019 = vmatpush1.bf16.msra.mxu0 0
          %1020 = vmatprep.subr.bf16.mxu0 0
          %1021 = vmatpush1.bf16.msra.mxu0 0
          %1022 = vmatprep.subr.bf16.mxu0 0
          %1023 = vmatpush1.bf16.msra.mxu0 0
          %1024 = vmatprep.subr.bf16.mxu0 0
          %1025 = vmatpush1.bf16.msra.mxu0 0
          %1026 = vmatprep.subr.bf16.mxu0 0
          %1027 = vmatpush1.bf16.msra.mxu0 0
          %1028 = vmatprep.subr.bf16.mxu0 0
          %1029 = vmatpush1.bf16.msra.mxu0 0
          %1030 = vmatprep.subr.bf16.mxu0 0
          %1031 = vmatpush1.bf16.msra.mxu0 0
          %1032 = vmatprep.subr.bf16.mxu0 0
          %1033 = vmatpush1.bf16.msra.mxu0 0
          %1034 = vmatprep.subr.bf16.mxu0 0
          %1035 = vmatpush1.bf16.msra.mxu0 0
          %1036 = vmatprep.subr.bf16.mxu0 0
          %1037 = vmatpush1.bf16.msra.mxu0 0
          %1038 = vmatprep.subr.bf16.mxu0 0
          %1039 = vmatpush1.bf16.msra.mxu0 0
          %1040 = vmatprep.subr.bf16.mxu0 0
          %1041 = vmatpush1.bf16.msra.mxu0 0
          %1042 = vmatprep.subr.bf16.mxu0 0
          %1043 = vmatpush1.bf16.msra.mxu0 0
          %1044 = vmatprep.subr.bf16.mxu0 0
          %1045 = vmatpush1.bf16.msra.mxu0 0
          %1046 = vmatprep.subr.bf16.mxu0 0
          %1047 = vmatpush1.bf16.msra.mxu0 0
          %1048 = vmatprep.mubr.bf16.mxu0 0
          %1049 = vmatmul.mubr.bf16.gmra.mrb[0].mxu0 %v1011
          %v1050 = vpop.f32.mrb[0].mxu0
          %v1051 = vadd.f32 0.0, %v1050
          %v1052 = vpop.f32.mrb[0].mxu0
          %v1053 = vpop.f32.mrb[0].mxu0
          %v1054 = vpop.f32.mrb[0].mxu0
          %1055 = vdwg.mxu0
          %v1057 = vsel %vm502, %v450, 0
          %v1060 = vsel %vm506, %v482, 0
          %1062 = vmatprep.subr.bf16.mxu0 0
          %1063 = vmatpush1.bf16.msra.mxu0 %v1060
          %1064 = vmatprep.subr.bf16.mxu0 0
          %1065 = vmatpush1.bf16.msra.mxu0 0
          %1066 = vmatprep.subr.bf16.mxu0 0
          %1067 = vmatpush1.bf16.msra.mxu0 0
          %1068 = vmatprep.subr.bf16.mxu0 0
          %1069 = vmatpush1.bf16.msra.mxu0 0
          %1070 = vmatprep.subr.bf16.mxu0 0
          %1071 = vmatpush1.bf16.msra.mxu0 0
          %1072 = vmatprep.subr.bf16.mxu0 0
          %1073 = vmatpush1.bf16.msra.mxu0 0
          %1074 = vmatprep.subr.bf16.mxu0 0
          %1075 = vmatpush1.bf16.msra.mxu0 0
          %1076 = vmatprep.subr.bf16.mxu0 0
          %1077 = vmatpush1.bf16.msra.mxu0 0
          %1078 = vmatprep.subr.bf16.mxu0 0
          %1079 = vmatpush1.bf16.msra.mxu0 0
          %1080 = vmatprep.subr.bf16.mxu0 0
          %1081 = vmatpush1.bf16.msra.mxu0 0
          %1082 = vmatprep.subr.bf16.mxu0 0
          %1083 = vmatpush1.bf16.msra.mxu0 0
          %1084 = vmatprep.subr.bf16.mxu0 0
          %1085 = vmatpush1.bf16.msra.mxu0 0
          %1086 = vmatprep.subr.bf16.mxu0 0
          %1087 = vmatpush1.bf16.msra.mxu0 0
          %1088 = vmatprep.subr.bf16.mxu0 0
          %1089 = vmatpush1.bf16.msra.mxu0 0
          %1090 = vmatprep.subr.bf16.mxu0 0
          %1091 = vmatpush1.bf16.msra.mxu0 0
          %1092 = vmatprep.subr.bf16.mxu0 0
          %1093 = vmatpush1.bf16.msra.mxu0 0
          %1094 = vmatprep.mubr.bf16.mxu0 0
          %1095 = vmatmul.mubr.bf16.gmra.mrb[0].mxu0 %v1057
          %v1096 = vpop.f32.mrb[0].mxu0
          %v1097 = vadd.f32 0.0, %v1096
          %v1098 = vpop.f32.mrb[0].mxu0
          %v1099 = vpop.f32.mrb[0].mxu0
          %v1100 = vpop.f32.mrb[0].mxu0
          %1101 = vdwg.mxu0
          %v1103 = vsel %vm502, %v451, 0
          %v1106 = vsel %vm506, %v483, 0
          %1108 = vmatprep.subr.bf16.mxu0 0
          %1109 = vmatpush1.bf16.msra.mxu0 %v1106
          %1110 = vmatprep.subr.bf16.mxu0 0
          %1111 = vmatpush1.bf16.msra.mxu0 0
          %1112 = vmatprep.subr.bf16.mxu0 0
          %1113 = vmatpush1.bf16.msra.mxu0 0
          %1114 = vmatprep.subr.bf16.mxu0 0
          %1115 = vmatpush1.bf16.msra.mxu0 0
          %1116 = vmatprep.subr.bf16.mxu0 0
          %1117 = vmatpush1.bf16.msra.mxu0 0
          %1118 = vmatprep.subr.bf16.mxu0 0
          %1119 = vmatpush1.bf16.msra.mxu0 0
          %1120 = vmatprep.subr.bf16.mxu0 0
          %1121 = vmatpush1.bf16.msra.mxu0 0
          %1122 = vmatprep.subr.bf16.mxu0 0
          %1123 = vmatpush1.bf16.msra.mxu0 0
          %1124 = vmatprep.subr.bf16.mxu0 0
          %1125 = vmatpush1.bf16.msra.mxu0 0
          %1126 = vmatprep.subr.bf16.mxu0 0
          %1127 = vmatpush1.bf16.msra.mxu0 0
          %1128 = vmatprep.subr.bf16.mxu0 0
          %1129 = vmatpush1.bf16.msra.mxu0 0
          %1130 = vmatprep.subr.bf16.mxu0 0
          %1131 = vmatpush1.bf16.msra.mxu0 0
          %1132 = vmatprep.subr.bf16.mxu0 0
          %1133 = vmatpush1.bf16.msra.mxu0 0
          %1134 = vmatprep.subr.bf16.mxu0 0
          %1135 = vmatpush1.bf16.msra.mxu0 0
          %1136 = vmatprep.subr.bf16.mxu0 0
          %1137 = vmatpush1.bf16.msra.mxu0 0
          %1138 = vmatprep.subr.bf16.mxu0 0
          %1139 = vmatpush1.bf16.msra.mxu0 0
          %1140 = vmatprep.mubr.bf16.mxu0 0
          %1141 = vmatmul.mubr.bf16.gmra.mrb[0].mxu0 %v1103
          %v1142 = vpop.f32.mrb[0].mxu0
          %v1143 = vadd.f32 0.0, %v1142
          %v1144 = vpop.f32.mrb[0].mxu0
          %v1145 = vpop.f32.mrb[0].mxu0
          %v1146 = vpop.f32.mrb[0].mxu0
          %1147 = vdwg.mxu0
          %v1149 = vsel %vm502, %v452, 0
          %v1152 = vsel %vm506, %v484, 0
          %1154 = vmatprep.subr.bf16.mxu0 0
          %1155 = vmatpush1.bf16.msra.mxu0 %v1152
          %1156 = vmatprep.subr.bf16.mxu0 0
          %1157 = vmatpush1.bf16.msra.mxu0 0
          %1158 = vmatprep.subr.bf16.mxu0 0
          %1159 = vmatpush1.bf16.msra.mxu0 0
          %1160 = vmatprep.subr.bf16.mxu0 0
          %1161 = vmatpush1.bf16.msra.mxu0 0
          %1162 = vmatprep.subr.bf16.mxu0 0
          %1163 = vmatpush1.bf16.msra.mxu0 0
          %1164 = vmatprep.subr.bf16.mxu0 0
          %1165 = vmatpush1.bf16.msra.mxu0 0
          %1166 = vmatprep.subr.bf16.mxu0 0
          %1167 = vmatpush1.bf16.msra.mxu0 0
          %1168 = vmatprep.subr.bf16.mxu0 0
          %1169 = vmatpush1.bf16.msra.mxu0 0
          %1170 = vmatprep.subr.bf16.mxu0 0
          %1171 = vmatpush1.bf16.msra.mxu0 0
          %1172 = vmatprep.subr.bf16.mxu0 0
          %1173 = vmatpush1.bf16.msra.mxu0 0
          %1174 = vmatprep.subr.bf16.mxu0 0
          %1175 = vmatpush1.bf16.msra.mxu0 0
          %1176 = vmatprep.subr.bf16.mxu0 0
          %1177 = vmatpush1.bf16.msra.mxu0 0
          %1178 = vmatprep.subr.bf16.mxu0 0
          %1179 = vmatpush1.bf16.msra.mxu0 0
          %1180 = vmatprep.subr.bf16.mxu0 0
          %1181 = vmatpush1.bf16.msra.mxu0 0
          %1182 = vmatprep.subr.bf16.mxu0 0
          %1183 = vmatpush1.bf16.msra.mxu0 0
          %1184 = vmatprep.subr.bf16.mxu0 0
          %1185 = vmatpush1.bf16.msra.mxu0 0
          %1186 = vmatprep.mubr.bf16.mxu0 0
          %1187 = vmatmul.mubr.bf16.gmra.mrb[0].mxu0 %v1149
          %v1188 = vpop.f32.mrb[0].mxu0
          %v1189 = vadd.f32 0.0, %v1188
          %v1190 = vpop.f32.mrb[0].mxu0
          %v1191 = vpop.f32.mrb[0].mxu0
          %v1192 = vpop.f32.mrb[0].mxu0
          %1193 = vdwg.mxu0
          %v1195 = vsel %vm502, %v453, 0
          %v1198 = vsel %vm506, %v485, 0
          %1200 = vmatprep.subr.bf16.mxu0 0
          %1201 = vmatpush1.bf16.msra.mxu0 %v1198
          %1202 = vmatprep.subr.bf16.mxu0 0
          %1203 = vmatpush1.bf16.msra.mxu0 0
          %1204 = vmatprep.subr.bf16.mxu0 0
          %1205 = vmatpush1.bf16.msra.mxu0 0
          %1206 = vmatprep.subr.bf16.mxu0 0
          %1207 = vmatpush1.bf16.msra.mxu0 0
          %1208 = vmatprep.subr.bf16.mxu0 0
          %1209 = vmatpush1.bf16.msra.mxu0 0
          %1210 = vmatprep.subr.bf16.mxu0 0
          %1211 = vmatpush1.bf16.msra.mxu0 0
          %1212 = vmatprep.subr.bf16.mxu0 0
          %1213 = vmatpush1.bf16.msra.mxu0 0
          %1214 = vmatprep.subr.bf16.mxu0 0
          %1215 = vmatpush1.bf16.msra.mxu0 0
          %1216 = vmatprep.subr.bf16.mxu0 0
          %1217 = vmatpush1.bf16.msra.mxu0 0
          %1218 = vmatprep.subr.bf16.mxu0 0
          %1219 = vmatpush1.bf16.msra.mxu0 0
          %1220 = vmatprep.subr.bf16.mxu0 0
          %1221 = vmatpush1.bf16.msra.mxu0 0
          %1222 = vmatprep.subr.bf16.mxu0 0
          %1223 = vmatpush1.bf16.msra.mxu0 0
          %1224 = vmatprep.subr.bf16.mxu0 0
          %1225 = vmatpush1.bf16.msra.mxu0 0
          %1226 = vmatprep.subr.bf16.mxu0 0
          %1227 = vmatpush1.bf16.msra.mxu0 0
          %1228 = vmatprep.subr.bf16.mxu0 0
          %1229 = vmatpush1.bf16.msra.mxu0 0
          %1230 = vmatprep.subr.bf16.mxu0 0
          %1231 = vmatpush1.bf16.msra.mxu0 0
          %1232 = vmatprep.mubr.bf16.mxu0 0
          %1233 = vmatmul.mubr.bf16.gmra.mrb[0].mxu0 %v1195
          %v1234 = vpop.f32.mrb[0].mxu0
          %v1235 = vadd.f32 0.0, %v1234
          %v1236 = vpop.f32.mrb[0].mxu0
          %v1237 = vpop.f32.mrb[0].mxu0
          %v1238 = vpop.f32.mrb[0].mxu0
          %1239 = vdwg.mxu0
          %v1241 = vsel %vm502, %v454, 0
          %v1244 = vsel %vm506, %v486, 0
          %1246 = vmatprep.subr.bf16.mxu0 0
          %1247 = vmatpush1.bf16.msra.mxu0 %v1244
          %1248 = vmatprep.subr.bf16.mxu0 0
          %1249 = vmatpush1.bf16.msra.mxu0 0
          %1250 = vmatprep.subr.bf16.mxu0 0
          %1251 = vmatpush1.bf16.msra.mxu0 0
          %1252 = vmatprep.subr.bf16.mxu0 0
          %1253 = vmatpush1.bf16.msra.mxu0 0
          %1254 = vmatprep.subr.bf16.mxu0 0
          %1255 = vmatpush1.bf16.msra.mxu0 0
          %1256 = vmatprep.subr.bf16.mxu0 0
          %1257 = vmatpush1.bf16.msra.mxu0 0
          %1258 = vmatprep.subr.bf16.mxu0 0
          %1259 = vmatpush1.bf16.msra.mxu0 0
          %1260 = vmatprep.subr.bf16.mxu0 0
          %1261 = vmatpush1.bf16.msra.mxu0 0
          %1262 = vmatprep.subr.bf16.mxu0 0
          %1263 = vmatpush1.bf16.msra.mxu0 0
          %1264 = vmatprep.subr.bf16.mxu0 0
          %1265 = vmatpush1.bf16.msra.mxu0 0
          %1266 = vmatprep.subr.bf16.mxu0 0
          %1267 = vmatpush1.bf16.msra.mxu0 0
          %1268 = vmatprep.subr.bf16.mxu0 0
          %1269 = vmatpush1.bf16.msra.mxu0 0
          %1270 = vmatprep.subr.bf16.mxu0 0
          %1271 = vmatpush1.bf16.msra.mxu0 0
          %1272 = vmatprep.subr.bf16.mxu0 0
          %1273 = vmatpush1.bf16.msra.mxu0 0
          %1274 = vmatprep.subr.bf16.mxu0 0
          %1275 = vmatpush1.bf16.msra.mxu0 0
          %1276 = vmatprep.subr.bf16.mxu0 0
          %1277 = vmatpush1.bf16.msra.mxu0 0
          %1278 = vmatprep.mubr.bf16.mxu0 0
          %1279 = vmatmul.mubr.bf16.gmra.mrb[0].mxu0 %v1241
          %v1280 = vpop.f32.mrb[0].mxu0
          %v1281 = vadd.f32 0.0, %v1280
          %v1282 = vpop.f32.mrb[0].mxu0
          %v1283 = vpop.f32.mrb[0].mxu0
          %v1284 = vpop.f32.mrb[0].mxu0
          %1285 = vdwg.mxu0
          %v1287 = vsel %vm502, %v455, 0
          %v1290 = vsel %vm506, %v487, 0
          %1292 = vmatprep.subr.bf16.mxu0 0
          %1293 = vmatpush1.bf16.msra.mxu0 %v1290
          %1294 = vmatprep.subr.bf16.mxu0 0
          %1295 = vmatpush1.bf16.msra.mxu0 0
          %1296 = vmatprep.subr.bf16.mxu0 0
          %1297 = vmatpush1.bf16.msra.mxu0 0
          %1298 = vmatprep.subr.bf16.mxu0 0
          %1299 = vmatpush1.bf16.msra.mxu0 0
          %1300 = vmatprep.subr.bf16.mxu0 0
          %1301 = vmatpush1.bf16.msra.mxu0 0
          %1302 = vmatprep.subr.bf16.mxu0 0
          %1303 = vmatpush1.bf16.msra.mxu0 0
          %1304 = vmatprep.subr.bf16.mxu0 0
          %1305 = vmatpush1.bf16.msra.mxu0 0
          %1306 = vmatprep.subr.bf16.mxu0 0
          %1307 = vmatpush1.bf16.msra.mxu0 0
          %1308 = vmatprep.subr.bf16.mxu0 0
          %1309 = vmatpush1.bf16.msra.mxu0 0
          %1310 = vmatprep.subr.bf16.mxu0 0
          %1311 = vmatpush1.bf16.msra.mxu0 0
          %1312 = vmatprep.subr.bf16.mxu0 0
          %1313 = vmatpush1.bf16.msra.mxu0 0
          %1314 = vmatprep.subr.bf16.mxu0 0
          %1315 = vmatpush1.bf16.msra.mxu0 0
          %1316 = vmatprep.subr.bf16.mxu0 0
          %1317 = vmatpush1.bf16.msra.mxu0 0
          %1318 = vmatprep.subr.bf16.mxu0 0
          %1319 = vmatpush1.bf16.msra.mxu0 0
          %1320 = vmatprep.subr.bf16.mxu0 0
          %1321 = vmatpush1.bf16.msra.mxu0 0
          %1322 = vmatprep.subr.bf16.mxu0 0
          %1323 = vmatpush1.bf16.msra.mxu0 0
          %1324 = vmatprep.mubr.bf16.mxu0 0
          %1325 = vmatmul.mubr.bf16.gmra.mrb[0].mxu0 %v1287
          %v1326 = vpop.f32.mrb[0].mxu0
          %v1327 = vadd.f32 0.0, %v1326
          %v1328 = vpop.f32.mrb[0].mxu0
          %v1329 = vpop.f32.mrb[0].mxu0
          %v1330 = vpop.f32.mrb[0].mxu0
          %1331 = vdwg.mxu0
          %v1333 = vsel %vm502, %v456, 0
          %v1336 = vsel %vm506, %v488, 0
          %1338 = vmatprep.subr.bf16.mxu0 0
          %1339 = vmatpush1.bf16.msra.mxu0 %v1336
          %1340 = vmatprep.subr.bf16.mxu0 0
          %1341 = vmatpush1.bf16.msra.mxu0 0
          %1342 = vmatprep.subr.bf16.mxu0 0
          %1343 = vmatpush1.bf16.msra.mxu0 0
          %1344 = vmatprep.subr.bf16.mxu0 0
          %1345 = vmatpush1.bf16.msra.mxu0 0
          %1346 = vmatprep.subr.bf16.mxu0 0
          %1347 = vmatpush1.bf16.msra.mxu0 0
          %1348 = vmatprep.subr.bf16.mxu0 0
          %1349 = vmatpush1.bf16.msra.mxu0 0
          %1350 = vmatprep.subr.bf16.mxu0 0
          %1351 = vmatpush1.bf16.msra.mxu0 0
          %1352 = vmatprep.subr.bf16.mxu0 0
          %1353 = vmatpush1.bf16.msra.mxu0 0
          %1354 = vmatprep.subr.bf16.mxu0 0
          %1355 = vmatpush1.bf16.msra.mxu0 0
          %1356 = vmatprep.subr.bf16.mxu0 0
          %1357 = vmatpush1.bf16.msra.mxu0 0
          %1358 = vmatprep.subr.bf16.mxu0 0
          %1359 = vmatpush1.bf16.msra.mxu0 0
          %1360 = vmatprep.subr.bf16.mxu0 0
          %1361 = vmatpush1.bf16.msra.mxu0 0
          %1362 = vmatprep.subr.bf16.mxu0 0
          %1363 = vmatpush1.bf16.msra.mxu0 0
          %1364 = vmatprep.subr.bf16.mxu0 0
          %1365 = vmatpush1.bf16.msra.mxu0 0
          %1366 = vmatprep.subr.bf16.mxu0 0
          %1367 = vmatpush1.bf16.msra.mxu0 0
          %1368 = vmatprep.subr.bf16.mxu0 0
          %1369 = vmatpush1.bf16.msra.mxu0 0
          %1370 = vmatprep.mubr.bf16.mxu0 0
          %1371 = vmatmul.mubr.bf16.gmra.mrb[0].mxu0 %v1333
          %v1372 = vpop.f32.mrb[0].mxu0
          %v1373 = vadd.f32 0.0, %v1372
          %v1374 = vpop.f32.mrb[0].mxu0
          %v1375 = vpop.f32.mrb[0].mxu0
          %v1376 = vpop.f32.mrb[0].mxu0
          %1377 = vdwg.mxu0
          %v1379 = vsel %vm502, %v457, 0
          %v1382 = vsel %vm506, %v489, 0
          %1384 = vmatprep.subr.bf16.mxu0 0
          %1385 = vmatpush1.bf16.msra.mxu0 %v1382
          %1386 = vmatprep.subr.bf16.mxu0 0
          %1387 = vmatpush1.bf16.msra.mxu0 0
          %1388 = vmatprep.subr.bf16.mxu0 0
          %1389 = vmatpush1.bf16.msra.mxu0 0
          %1390 = vmatprep.subr.bf16.mxu0 0
          %1391 = vmatpush1.bf16.msra.mxu0 0
          %1392 = vmatprep.subr.bf16.mxu0 0
          %1393 = vmatpush1.bf16.msra.mxu0 0
          %1394 = vmatprep.subr.bf16.mxu0 0
          %1395 = vmatpush1.bf16.msra.mxu0 0
          %1396 = vmatprep.subr.bf16.mxu0 0
          %1397 = vmatpush1.bf16.msra.mxu0 0
          %1398 = vmatprep.subr.bf16.mxu0 0
          %1399 = vmatpush1.bf16.msra.mxu0 0
          %1400 = vmatprep.subr.bf16.mxu0 0
          %1401 = vmatpush1.bf16.msra.mxu0 0
          %1402 = vmatprep.subr.bf16.mxu0 0
          %1403 = vmatpush1.bf16.msra.mxu0 0
          %1404 = vmatprep.subr.bf16.mxu0 0
          %1405 = vmatpush1.bf16.msra.mxu0 0
          %1406 = vmatprep.subr.bf16.mxu0 0
          %1407 = vmatpush1.bf16.msra.mxu0 0
          %1408 = vmatprep.subr.bf16.mxu0 0
          %1409 = vmatpush1.bf16.msra.mxu0 0
          %1410 = vmatprep.subr.bf16.mxu0 0
          %1411 = vmatpush1.bf16.msra.mxu0 0
          %1412 = vmatprep.subr.bf16.mxu0 0
          %1413 = vmatpush1.bf16.msra.mxu0 0
          %1414 = vmatprep.subr.bf16.mxu0 0
          %1415 = vmatpush1.bf16.msra.mxu0 0
          %1416 = vmatprep.mubr.bf16.mxu0 0
          %1417 = vmatmul.mubr.bf16.gmra.mrb[0].mxu0 %v1379
          %v1418 = vpop.f32.mrb[0].mxu0
          %v1419 = vadd.f32 0.0, %v1418
          %v1420 = vpop.f32.mrb[0].mxu0
          %v1421 = vpop.f32.mrb[0].mxu0
          %v1422 = vpop.f32.mrb[0].mxu0
          %1423 = vdwg.mxu0
          %v1425 = vsel %vm502, %v458, 0
          %v1428 = vsel %vm506, %v490, 0
          %1430 = vmatprep.subr.bf16.mxu0 0
          %1431 = vmatpush1.bf16.msra.mxu0 %v1428
          %1432 = vmatprep.subr.bf16.mxu0 0
          %1433 = vmatpush1.bf16.msra.mxu0 0
          %1434 = vmatprep.subr.bf16.mxu0 0
          %1435 = vmatpush1.bf16.msra.mxu0 0
          %1436 = vmatprep.subr.bf16.mxu0 0
          %1437 = vmatpush1.bf16.msra.mxu0 0
          %1438 = vmatprep.subr.bf16.mxu0 0
          %1439 = vmatpush1.bf16.msra.mxu0 0
          %1440 = vmatprep.subr.bf16.mxu0 0
          %1441 = vmatpush1.bf16.msra.mxu0 0
          %1442 = vmatprep.subr.bf16.mxu0 0
          %1443 = vmatpush1.bf16.msra.mxu0 0
          %1444 = vmatprep.subr.bf16.mxu0 0
          %1445 = vmatpush1.bf16.msra.mxu0 0
          %1446 = vmatprep.subr.bf16.mxu0 0
          %1447 = vmatpush1.bf16.msra.mxu0 0
          %1448 = vmatprep.subr.bf16.mxu0 0
          %1449 = vmatpush1.bf16.msra.mxu0 0
          %1450 = vmatprep.subr.bf16.mxu0 0
          %1451 = vmatpush1.bf16.msra.mxu0 0
          %1452 = vmatprep.subr.bf16.mxu0 0
          %1453 = vmatpush1.bf16.msra.mxu0 0
          %1454 = vmatprep.subr.bf16.mxu0 0
          %1455 = vmatpush1.bf16.msra.mxu0 0
          %1456 = vmatprep.subr.bf16.mxu0 0
          %1457 = vmatpush1.bf16.msra.mxu0 0
          %1458 = vmatprep.subr.bf16.mxu0 0
          %1459 = vmatpush1.bf16.msra.mxu0 0
          %1460 = vmatprep.subr.bf16.mxu0 0
          %1461 = vmatpush1.bf16.msra.mxu0 0
          %1462 = vmatprep.mubr.bf16.mxu0 0
          %1463 = vmatmul.mubr.bf16.gmra.mrb[0].mxu0 %v1425
          %v1464 = vpop.f32.mrb[0].mxu0
          %v1465 = vadd.f32 0.0, %v1464
          %v1466 = vpop.f32.mrb[0].mxu0
          %v1467 = vpop.f32.mrb[0].mxu0
          %v1468 = vpop.f32.mrb[0].mxu0
          %1469 = vdwg.mxu0
          %v1471 = vsel %vm502, %v459, 0
          %v1474 = vsel %vm506, %v491, 0
          %1476 = vmatprep.subr.bf16.mxu0 0
          %1477 = vmatpush1.bf16.msra.mxu0 %v1474
          %1478 = vmatprep.subr.bf16.mxu0 0
          %1479 = vmatpush1.bf16.msra.mxu0 0
          %1480 = vmatprep.subr.bf16.mxu0 0
          %1481 = vmatpush1.bf16.msra.mxu0 0
          %1482 = vmatprep.subr.bf16.mxu0 0
          %1483 = vmatpush1.bf16.msra.mxu0 0
          %1484 = vmatprep.subr.bf16.mxu0 0
          %1485 = vmatpush1.bf16.msra.mxu0 0
          %1486 = vmatprep.subr.bf16.mxu0 0
          %1487 = vmatpush1.bf16.msra.mxu0 0
          %1488 = vmatprep.subr.bf16.mxu0 0
          %1489 = vmatpush1.bf16.msra.mxu0 0
          %1490 = vmatprep.subr.bf16.mxu0 0
          %1491 = vmatpush1.bf16.msra.mxu0 0
          %1492 = vmatprep.subr.bf16.mxu0 0
          %1493 = vmatpush1.bf16.msra.mxu0 0
          %1494 = vmatprep.subr.bf16.mxu0 0
          %1495 = vmatpush1.bf16.msra.mxu0 0
          %1496 = vmatprep.subr.bf16.mxu0 0
          %1497 = vmatpush1.bf16.msra.mxu0 0
          %1498 = vmatprep.subr.bf16.mxu0 0
          %1499 = vmatpush1.bf16.msra.mxu0 0
          %1500 = vmatprep.subr.bf16.mxu0 0
          %1501 = vmatpush1.bf16.msra.mxu0 0
          %1502 = vmatprep.subr.bf16.mxu0 0
          %1503 = vmatpush1.bf16.msra.mxu0 0
          %1504 = vmatprep.subr.bf16.mxu0 0
          %1505 = vmatpush1.bf16.msra.mxu0 0
          %1506 = vmatprep.subr.bf16.mxu0 0
          %1507 = vmatpush1.bf16.msra.mxu0 0
          %1508 = vmatprep.mubr.bf16.mxu0 0
          %1509 = vmatmul.mubr.bf16.gmra.mrb[0].mxu0 %v1471
          %v1510 = vpop.f32.mrb[0].mxu0
          %v1511 = vadd.f32 0.0, %v1510
          %v1512 = vpop.f32.mrb[0].mxu0
          %v1513 = vpop.f32.mrb[0].mxu0
          %v1514 = vpop.f32.mrb[0].mxu0
          %1515 = vdwg.mxu0
          %v1517 = vsel %vm502, %v460, 0
          %v1520 = vsel %vm506, %v492, 0
          %1522 = vmatprep.subr.bf16.mxu0 0
          %1523 = vmatpush1.bf16.msra.mxu0 %v1520
          %1524 = vmatprep.subr.bf16.mxu0 0
          %1525 = vmatpush1.bf16.msra.mxu0 0
          %1526 = vmatprep.subr.bf16.mxu0 0
          %1527 = vmatpush1.bf16.msra.mxu0 0
          %1528 = vmatprep.subr.bf16.mxu0 0
          %1529 = vmatpush1.bf16.msra.mxu0 0
          %1530 = vmatprep.subr.bf16.mxu0 0
          %1531 = vmatpush1.bf16.msra.mxu0 0
          %1532 = vmatprep.subr.bf16.mxu0 0
          %1533 = vmatpush1.bf16.msra.mxu0 0
          %1534 = vmatprep.subr.bf16.mxu0 0
          %1535 = vmatpush1.bf16.msra.mxu0 0
          %1536 = vmatprep.subr.bf16.mxu0 0
          %1537 = vmatpush1.bf16.msra.mxu0 0
          %1538 = vmatprep.subr.bf16.mxu0 0
          %1539 = vmatpush1.bf16.msra.mxu0 0
          %1540 = vmatprep.subr.bf16.mxu0 0
          %1541 = vmatpush1.bf16.msra.mxu0 0
          %1542 = vmatprep.subr.bf16.mxu0 0
          %1543 = vmatpush1.bf16.msra.mxu0 0
          %1544 = vmatprep.subr.bf16.mxu0 0
          %1545 = vmatpush1.bf16.msra.mxu0 0
          %1546 = vmatprep.subr.bf16.mxu0 0
          %1547 = vmatpush1.bf16.msra.mxu0 0
          %1548 = vmatprep.subr.bf16.mxu0 0
          %1549 = vmatpush1.bf16.msra.mxu0 0
          %1550 = vmatprep.subr.bf16.mxu0 0
          %1551 = vmatpush1.bf16.msra.mxu0 0
          %1552 = vmatprep.subr.bf16.mxu0 0
          %1553 = vmatpush1.bf16.msra.mxu0 0
          %1554 = vmatprep.mubr.bf16.mxu0 0
          %1555 = vmatmul.mubr.bf16.gmra.mrb[0].mxu0 %v1517
          %v1556 = vpop.f32.mrb[0].mxu0
          %v1557 = vadd.f32 0.0, %v1556
          %v1558 = vpop.f32.mrb[0].mxu0
          %v1559 = vpop.f32.mrb[0].mxu0
          %v1560 = vpop.f32.mrb[0].mxu0
          %1561 = vdwg.mxu0
          %v1563 = vsel %vm502, %v461, 0
          %v1566 = vsel %vm506, %v493, 0
          %1568 = vmatprep.subr.bf16.mxu0 0
          %1569 = vmatpush1.bf16.msra.mxu0 %v1566
          %1570 = vmatprep.subr.bf16.mxu0 0
          %1571 = vmatpush1.bf16.msra.mxu0 0
          %1572 = vmatprep.subr.bf16.mxu0 0
          %1573 = vmatpush1.bf16.msra.mxu0 0
          %1574 = vmatprep.subr.bf16.mxu0 0
          %1575 = vmatpush1.bf16.msra.mxu0 0
          %1576 = vmatprep.subr.bf16.mxu0 0
          %1577 = vmatpush1.bf16.msra.mxu0 0
          %1578 = vmatprep.subr.bf16.mxu0 0
          %1579 = vmatpush1.bf16.msra.mxu0 0
          %1580 = vmatprep.subr.bf16.mxu0 0
          %1581 = vmatpush1.bf16.msra.mxu0 0
          %1582 = vmatprep.subr.bf16.mxu0 0
          %1583 = vmatpush1.bf16.msra.mxu0 0
          %1584 = vmatprep.subr.bf16.mxu0 0
          %1585 = vmatpush1.bf16.msra.mxu0 0
          %1586 = vmatprep.subr.bf16.mxu0 0
          %1587 = vmatpush1.bf16.msra.mxu0 0
          %1588 = vmatprep.subr.bf16.mxu0 0
          %1589 = vmatpush1.bf16.msra.mxu0 0
          %1590 = vmatprep.subr.bf16.mxu0 0
          %1591 = vmatpush1.bf16.msra.mxu0 0
          %1592 = vmatprep.subr.bf16.mxu0 0
          %1593 = vmatpush1.bf16.msra.mxu0 0
          %1594 = vmatprep.subr.bf16.mxu0 0
          %1595 = vmatpush1.bf16.msra.mxu0 0
          %1596 = vmatprep.subr.bf16.mxu0 0
          %1597 = vmatpush1.bf16.msra.mxu0 0
          %1598 = vmatprep.subr.bf16.mxu0 0
          %1599 = vmatpush1.bf16.msra.mxu0 0
          %1600 = vmatprep.mubr.bf16.mxu0 0
          %1601 = vmatmul.mubr.bf16.gmra.mrb[0].mxu0 %v1563
          %v1602 = vpop.f32.mrb[0].mxu0
          %v1603 = vadd.f32 0.0, %v1602
          %v1604 = vpop.f32.mrb[0].mxu0
          %v1605 = vpop.f32.mrb[0].mxu0
          %v1606 = vpop.f32.mrb[0].mxu0
          %1607 = vdwg.mxu0
          %v1609 = vsel %vm502, %v462, 0
          %v1612 = vsel %vm506, %v494, 0
          %1614 = vmatprep.subr.bf16.mxu0 0
          %1615 = vmatpush1.bf16.msra.mxu0 %v1612
          %1616 = vmatprep.subr.bf16.mxu0 0
          %1617 = vmatpush1.bf16.msra.mxu0 0
          %1618 = vmatprep.subr.bf16.mxu0 0
          %1619 = vmatpush1.bf16.msra.mxu0 0
          %1620 = vmatprep.subr.bf16.mxu0 0
          %1621 = vmatpush1.bf16.msra.mxu0 0
          %1622 = vmatprep.subr.bf16.mxu0 0
          %1623 = vmatpush1.bf16.msra.mxu0 0
          %1624 = vmatprep.subr.bf16.mxu0 0
          %1625 = vmatpush1.bf16.msra.mxu0 0
          %1626 = vmatprep.subr.bf16.mxu0 0
          %1627 = vmatpush1.bf16.msra.mxu0 0
          %1628 = vmatprep.subr.bf16.mxu0 0
          %1629 = vmatpush1.bf16.msra.mxu0 0
          %1630 = vmatprep.subr.bf16.mxu0 0
          %1631 = vmatpush1.bf16.msra.mxu0 0
          %1632 = vmatprep.subr.bf16.mxu0 0
          %1633 = vmatpush1.bf16.msra.mxu0 0
          %1634 = vmatprep.subr.bf16.mxu0 0
          %1635 = vmatpush1.bf16.msra.mxu0 0
          %1636 = vmatprep.subr.bf16.mxu0 0
          %1637 = vmatpush1.bf16.msra.mxu0 0
          %1638 = vmatprep.subr.bf16.mxu0 0
          %1639 = vmatpush1.bf16.msra.mxu0 0
          %1640 = vmatprep.subr.bf16.mxu0 0
          %1641 = vmatpush1.bf16.msra.mxu0 0
          %1642 = vmatprep.subr.bf16.mxu0 0
          %1643 = vmatpush1.bf16.msra.mxu0 0
          %1644 = vmatprep.subr.bf16.mxu0 0
          %1645 = vmatpush1.bf16.msra.mxu0 0
          %1646 = vmatprep.mubr.bf16.mxu0 0
          %1647 = vmatmul.mubr.bf16.gmra.mrb[0].mxu0 %v1609
          %v1648 = vpop.f32.mrb[0].mxu0
          %v1649 = vadd.f32 0.0, %v1648
          %v1650 = vpop.f32.mrb[0].mxu0
          %v1651 = vpop.f32.mrb[0].mxu0
          %v1652 = vpop.f32.mrb[0].mxu0
          %1653 = vdwg.mxu0
          %v1655 = vsel %vm502, %v463, 0
          %v1658 = vsel %vm506, %v495, 0
          %1660 = vmatprep.subr.bf16.mxu0 0
          %1661 = vmatpush1.bf16.msra.mxu0 %v1658
          %1662 = vmatprep.subr.bf16.mxu0 0
          %1663 = vmatpush1.bf16.msra.mxu0 0
          %1664 = vmatprep.subr.bf16.mxu0 0
          %1665 = vmatpush1.bf16.msra.mxu0 0
          %1666 = vmatprep.subr.bf16.mxu0 0
          %1667 = vmatpush1.bf16.msra.mxu0 0
          %1668 = vmatprep.subr.bf16.mxu0 0
          %1669 = vmatpush1.bf16.msra.mxu0 0
          %1670 = vmatprep.subr.bf16.mxu0 0
          %1671 = vmatpush1.bf16.msra.mxu0 0
          %1672 = vmatprep.subr.bf16.mxu0 0
          %1673 = vmatpush1.bf16.msra.mxu0 0
          %1674 = vmatprep.subr.bf16.mxu0 0
          %1675 = vmatpush1.bf16.msra.mxu0 0
          %1676 = vmatprep.subr.bf16.mxu0 0
          %1677 = vmatpush1.bf16.msra.mxu0 0
          %1678 = vmatprep.subr.bf16.mxu0 0
          %1679 = vmatpush1.bf16.msra.mxu0 0
          %1680 = vmatprep.subr.bf16.mxu0 0
          %1681 = vmatpush1.bf16.msra.mxu0 0
          %1682 = vmatprep.subr.bf16.mxu0 0
          %1683 = vmatpush1.bf16.msra.mxu0 0
          %1684 = vmatprep.subr.bf16.mxu0 0
          %1685 = vmatpush1.bf16.msra.mxu0 0
          %1686 = vmatprep.subr.bf16.mxu0 0
          %1687 = vmatpush1.bf16.msra.mxu0 0
          %1688 = vmatprep.subr.bf16.mxu0 0
          %1689 = vmatpush1.bf16.msra.mxu0 0
          %1690 = vmatprep.subr.bf16.mxu0 0
          %1691 = vmatpush1.bf16.msra.mxu0 0
          %1692 = vmatprep.mubr.bf16.mxu0 0
          %1693 = vmatmul.mubr.bf16.gmra.mrb[0].mxu0 %v1655
          %v1694 = vpop.f32.mrb[0].mxu0
          %v1695 = vadd.f32 0.0, %v1694
          %v1696 = vpop.f32.mrb[0].mxu0
          %v1697 = vpop.f32.mrb[0].mxu0
          %v1698 = vpop.f32.mrb[0].mxu0
          %1699 = vdwg.mxu0
          %v1701 = vsel %vm502, %v464, 0
          %v1704 = vsel %vm506, %v496, 0
          %1706 = vmatprep.subr.bf16.mxu0 0
          %1707 = vmatpush1.bf16.msra.mxu0 %v1704
          %1708 = vmatprep.subr.bf16.mxu0 0
          %1709 = vmatpush1.bf16.msra.mxu0 0
          %1710 = vmatprep.subr.bf16.mxu0 0
          %1711 = vmatpush1.bf16.msra.mxu0 0
          %1712 = vmatprep.subr.bf16.mxu0 0
          %1713 = vmatpush1.bf16.msra.mxu0 0
          %1714 = vmatprep.subr.bf16.mxu0 0
          %1715 = vmatpush1.bf16.msra.mxu0 0
          %1716 = vmatprep.subr.bf16.mxu0 0
          %1717 = vmatpush1.bf16.msra.mxu0 0
          %1718 = vmatprep.subr.bf16.mxu0 0
          %1719 = vmatpush1.bf16.msra.mxu0 0
          %1720 = vmatprep.subr.bf16.mxu0 0
          %1721 = vmatpush1.bf16.msra.mxu0 0
          %1722 = vmatprep.subr.bf16.mxu0 0
          %1723 = vmatpush1.bf16.msra.mxu0 0
          %1724 = vmatprep.subr.bf16.mxu0 0
          %1725 = vmatpush1.bf16.msra.mxu0 0
          %1726 = vmatprep.subr.bf16.mxu0 0
          %1727 = vmatpush1.bf16.msra.mxu0 0
          %1728 = vmatprep.subr.bf16.mxu0 0
          %1729 = vmatpush1.bf16.msra.mxu0 0
          %1730 = vmatprep.subr.bf16.mxu0 0
          %1731 = vmatpush1.bf16.msra.mxu0 0
          %1732 = vmatprep.subr.bf16.mxu0 0
          %1733 = vmatpush1.bf16.msra.mxu0 0
          %1734 = vmatprep.subr.bf16.mxu0 0
          %1735 = vmatpush1.bf16.msra.mxu0 0
          %1736 = vmatprep.subr.bf16.mxu0 0
          %1737 = vmatpush1.bf16.msra.mxu0 0
          %1738 = vmatprep.mubr.bf16.mxu0 0
          %1739 = vmatmul.mubr.bf16.gmra.mrb[0].mxu0 %v1701
          %v1740 = vpop.f32.mrb[0].mxu0
          %v1741 = vadd.f32 0.0, %v1740
          %v1742 = vpop.f32.mrb[0].mxu0
          %v1743 = vpop.f32.mrb[0].mxu0
          %v1744 = vpop.f32.mrb[0].mxu0
          %1745 = vdwg.mxu0
          %v1747 = vsel %vm502, %v465, 0
          %v1750 = vsel %vm506, %v497, 0
          %1752 = vmatprep.subr.bf16.mxu0 0
          %1753 = vmatpush1.bf16.msra.mxu0 %v1750
          %1754 = vmatprep.subr.bf16.mxu0 0
          %1755 = vmatpush1.bf16.msra.mxu0 0
          %1756 = vmatprep.subr.bf16.mxu0 0
          %1757 = vmatpush1.bf16.msra.mxu0 0
          %1758 = vmatprep.subr.bf16.mxu0 0
          %1759 = vmatpush1.bf16.msra.mxu0 0
          %1760 = vmatprep.subr.bf16.mxu0 0
          %1761 = vmatpush1.bf16.msra.mxu0 0
          %1762 = vmatprep.subr.bf16.mxu0 0
          %1763 = vmatpush1.bf16.msra.mxu0 0
          %1764 = vmatprep.subr.bf16.mxu0 0
          %1765 = vmatpush1.bf16.msra.mxu0 0
          %1766 = vmatprep.subr.bf16.mxu0 0
          %1767 = vmatpush1.bf16.msra.mxu0 0
          %1768 = vmatprep.subr.bf16.mxu0 0
          %1769 = vmatpush1.bf16.msra.mxu0 0
          %1770 = vmatprep.subr.bf16.mxu0 0
          %1771 = vmatpush1.bf16.msra.mxu0 0
          %1772 = vmatprep.subr.bf16.mxu0 0
          %1773 = vmatpush1.bf16.msra.mxu0 0
          %1774 = vmatprep.subr.bf16.mxu0 0
          %1775 = vmatpush1.bf16.msra.mxu0 0
          %1776 = vmatprep.subr.bf16.mxu0 0
          %1777 = vmatpush1.bf16.msra.mxu0 0
          %1778 = vmatprep.subr.bf16.mxu0 0
          %1779 = vmatpush1.bf16.msra.mxu0 0
          %1780 = vmatprep.subr.bf16.mxu0 0
          %1781 = vmatpush1.bf16.msra.mxu0 0
          %1782 = vmatprep.subr.bf16.mxu0 0
          %1783 = vmatpush1.bf16.msra.mxu0 0
          %1784 = vmatprep.mubr.bf16.mxu0 0
          %1785 = vmatmul.mubr.bf16.gmra.mrb[0].mxu0 %v1747
          %v1786 = vpop.f32.mrb[0].mxu0
          %v1787 = vadd.f32 0.0, %v1786
          %v1788 = vpop.f32.mrb[0].mxu0
          %v1789 = vpop.f32.mrb[0].mxu0
          %v1790 = vpop.f32.mrb[0].mxu0
          %1791 = vdwg.mxu0
          %v1793 = vsel %vm502, %v466, 0
          %v1796 = vsel %vm506, %v498, 0
          %1798 = vmatprep.subr.bf16.mxu0 0
          %1799 = vmatpush1.bf16.msra.mxu0 %v1796
          %1800 = vmatprep.subr.bf16.mxu0 0
          %1801 = vmatpush1.bf16.msra.mxu0 0
          %1802 = vmatprep.subr.bf16.mxu0 0
          %1803 = vmatpush1.bf16.msra.mxu0 0
          %1804 = vmatprep.subr.bf16.mxu0 0
          %1805 = vmatpush1.bf16.msra.mxu0 0
          %1806 = vmatprep.subr.bf16.mxu0 0
          %1807 = vmatpush1.bf16.msra.mxu0 0
          %1808 = vmatprep.subr.bf16.mxu0 0
          %1809 = vmatpush1.bf16.msra.mxu0 0
          %1810 = vmatprep.subr.bf16.mxu0 0
          %1811 = vmatpush1.bf16.msra.mxu0 0
          %1812 = vmatprep.subr.bf16.mxu0 0
          %1813 = vmatpush1.bf16.msra.mxu0 0
          %1814 = vmatprep.subr.bf16.mxu0 0
          %1815 = vmatpush1.bf16.msra.mxu0 0
          %1816 = vmatprep.subr.bf16.mxu0 0
          %1817 = vmatpush1.bf16.msra.mxu0 0
          %1818 = vmatprep.subr.bf16.mxu0 0
          %1819 = vmatpush1.bf16.msra.mxu0 0
          %1820 = vmatprep.subr.bf16.mxu0 0
          %1821 = vmatpush1.bf16.msra.mxu0 0
          %1822 = vmatprep.subr.bf16.mxu0 0
          %1823 = vmatpush1.bf16.msra.mxu0 0
          %1824 = vmatprep.subr.bf16.mxu0 0
          %1825 = vmatpush1.bf16.msra.mxu0 0
          %1826 = vmatprep.subr.bf16.mxu0 0
          %1827 = vmatpush1.bf16.msra.mxu0 0
          %1828 = vmatprep.subr.bf16.mxu0 0
          %1829 = vmatpush1.bf16.msra.mxu0 0
          %1830 = vmatprep.mubr.bf16.mxu0 0
          %1831 = vmatmul.mubr.bf16.gmra.mrb[0].mxu0 %v1793
          %v1832 = vpop.f32.mrb[0].mxu0
          %v1833 = vadd.f32 0.0, %v1832
          %v1834 = vpop.f32.mrb[0].mxu0
          %v1835 = vpop.f32.mrb[0].mxu0
          %v1836 = vpop.f32.mrb[0].mxu0
          %1837 = vdwg.mxu0
          %v1839 = vsel %vm502, %v467, 0
          %v1842 = vsel %vm506, %v499, 0
          %1844 = vmatprep.subr.bf16.mxu0 0
          %1845 = vmatpush1.bf16.msra.mxu0 %v1842
          %1846 = vmatprep.subr.bf16.mxu0 0
          %1847 = vmatpush1.bf16.msra.mxu0 0
          %1848 = vmatprep.subr.bf16.mxu0 0
          %1849 = vmatpush1.bf16.msra.mxu0 0
          %1850 = vmatprep.subr.bf16.mxu0 0
          %1851 = vmatpush1.bf16.msra.mxu0 0
          %1852 = vmatprep.subr.bf16.mxu0 0
          %1853 = vmatpush1.bf16.msra.mxu0 0
          %1854 = vmatprep.subr.bf16.mxu0 0
          %1855 = vmatpush1.bf16.msra.mxu0 0
          %1856 = vmatprep.subr.bf16.mxu0 0
          %1857 = vmatpush1.bf16.msra.mxu0 0
          %1858 = vmatprep.subr.bf16.mxu0 0
          %1859 = vmatpush1.bf16.msra.mxu0 0
          %1860 = vmatprep.subr.bf16.mxu0 0
          %1861 = vmatpush1.bf16.msra.mxu0 0
          %1862 = vmatprep.subr.bf16.mxu0 0
          %1863 = vmatpush1.bf16.msra.mxu0 0
          %1864 = vmatprep.subr.bf16.mxu0 0
          %1865 = vmatpush1.bf16.msra.mxu0 0
          %1866 = vmatprep.subr.bf16.mxu0 0
          %1867 = vmatpush1.bf16.msra.mxu0 0
          %1868 = vmatprep.subr.bf16.mxu0 0
          %1869 = vmatpush1.bf16.msra.mxu0 0
          %1870 = vmatprep.subr.bf16.mxu0 0
          %1871 = vmatpush1.bf16.msra.mxu0 0
          %1872 = vmatprep.subr.bf16.mxu0 0
          %1873 = vmatpush1.bf16.msra.mxu0 0
          %1874 = vmatprep.subr.bf16.mxu0 0
          %1875 = vmatpush1.bf16.msra.mxu0 0
          %1876 = vmatprep.mubr.bf16.mxu0 0
          %1877 = vmatmul.mubr.bf16.gmra.mrb[0].mxu0 %v1839
          %v1878 = vpop.f32.mrb[0].mxu0
          %v1879 = vadd.f32 0.0, %v1878
          %v1880 = vpop.f32.mrb[0].mxu0
          %v1881 = vpop.f32.mrb[0].mxu0
          %v1882 = vpop.f32.mrb[0].mxu0
          %1883 = vdwg.mxu0
          %v1885 = vsel %vm502, %v468, 0
          %v1888 = vsel %vm506, %v500, 0
          %1890 = vmatprep.subr.bf16.mxu0 0
          %1891 = vmatpush1.bf16.msra.mxu0 %v1888
          %1892 = vmatprep.subr.bf16.mxu0 0
          %1893 = vmatpush1.bf16.msra.mxu0 0
          %1894 = vmatprep.subr.bf16.mxu0 0
          %1895 = vmatpush1.bf16.msra.mxu0 0
          %1896 = vmatprep.subr.bf16.mxu0 0
          %1897 = vmatpush1.bf16.msra.mxu0 0
          %1898 = vmatprep.subr.bf16.mxu0 0
          %1899 = vmatpush1.bf16.msra.mxu0 0
          %1900 = vmatprep.subr.bf16.mxu0 0
          %1901 = vmatpush1.bf16.msra.mxu0 0
          %1902 = vmatprep.subr.bf16.mxu0 0
          %1903 = vmatpush1.bf16.msra.mxu0 0
          %1904 = vmatprep.subr.bf16.mxu0 0
          %1905 = vmatpush1.bf16.msra.mxu0 0
          %1906 = vmatprep.subr.bf16.mxu0 0
          %1907 = vmatpush1.bf16.msra.mxu0 0
          %1908 = vmatprep.subr.bf16.mxu0 0
          %1909 = vmatpush1.bf16.msra.mxu0 0
          %1910 = vmatprep.subr.bf16.mxu0 0
          %1911 = vmatpush1.bf16.msra.mxu0 0
          %1912 = vmatprep.subr.bf16.mxu0 0
          %1913 = vmatpush1.bf16.msra.mxu0 0
          %1914 = vmatprep.subr.bf16.mxu0 0
          %1915 = vmatpush1.bf16.msra.mxu0 0
          %1916 = vmatprep.subr.bf16.mxu0 0
          %1917 = vmatpush1.bf16.msra.mxu0 0
          %1918 = vmatprep.subr.bf16.mxu0 0
          %1919 = vmatpush1.bf16.msra.mxu0 0
          %1920 = vmatprep.subr.bf16.mxu0 0
          %1921 = vmatpush1.bf16.msra.mxu0 0
          %1922 = vmatprep.mubr.bf16.mxu0 0
          %1923 = vmatmul.mubr.bf16.gmra.mrb[0].mxu0 %v1885
          %v1924 = vpop.f32.mrb[0].mxu0
          %v1925 = vadd.f32 0.0, %v1924
          %v1926 = vpop.f32.mrb[0].mxu0
          %v1927 = vpop.f32.mrb[0].mxu0
          %v1928 = vpop.f32.mrb[0].mxu0
          %1929 = vdwg.mxu0
          %v1931 = vsel %vm502, %v469, 0
          %v1934 = vsel %vm506, %v501, 0
          %1936 = vmatprep.subr.bf16.mxu0 0
          %1937 = vmatpush1.bf16.msra.mxu0 %v1934
          %1938 = vmatprep.subr.bf16.mxu0 0
          %1939 = vmatpush1.bf16.msra.mxu0 0
          %1940 = vmatprep.subr.bf16.mxu0 0
          %1941 = vmatpush1.bf16.msra.mxu0 0
          %1942 = vmatprep.subr.bf16.mxu0 0
          %1943 = vmatpush1.bf16.msra.mxu0 0
          %1944 = vmatprep.subr.bf16.mxu0 0
          %1945 = vmatpush1.bf16.msra.mxu0 0
          %1946 = vmatprep.subr.bf16.mxu0 0
          %1947 = vmatpush1.bf16.msra.mxu0 0
          %1948 = vmatprep.subr.bf16.mxu0 0
          %1949 = vmatpush1.bf16.msra.mxu0 0
          %1950 = vmatprep.subr.bf16.mxu0 0
          %1951 = vmatpush1.bf16.msra.mxu0 0
          %1952 = vmatprep.subr.bf16.mxu0 0
          %1953 = vmatpush1.bf16.msra.mxu0 0
          %1954 = vmatprep.subr.bf16.mxu0 0
          %1955 = vmatpush1.bf16.msra.mxu0 0
          %1956 = vmatprep.subr.bf16.mxu0 0
          %1957 = vmatpush1.bf16.msra.mxu0 0
          %1958 = vmatprep.subr.bf16.mxu0 0
          %1959 = vmatpush1.bf16.msra.mxu0 0
          %1960 = vmatprep.subr.bf16.mxu0 0
          %1961 = vmatpush1.bf16.msra.mxu0 0
          %1962 = vmatprep.subr.bf16.mxu0 0
          %1963 = vmatpush1.bf16.msra.mxu0 0
          %1964 = vmatprep.subr.bf16.mxu0 0
          %1965 = vmatpush1.bf16.msra.mxu0 0
          %1966 = vmatprep.subr.bf16.mxu0 0
          %1967 = vmatpush1.bf16.msra.mxu0 0
          %1968 = vmatprep.mubr.bf16.mxu0 0
          %1969 = vmatmul.mubr.bf16.gmra.mrb[0].mxu0 %v1931
          %v1970 = vpop.f32.mrb[0].mxu0
          %v1971 = vadd.f32 0.0, %v1970
          %v1972 = vpop.f32.mrb[0].mxu0
          %v1973 = vpop.f32.mrb[0].mxu0
          %v1974 = vpop.f32.mrb[0].mxu0
          %1975 = vdwg.mxu0
          %v1976 = vadd.f32 %v406, %v545
          %v1977 = vadd.f32 %v407, %v591
          %v1978 = vadd.f32 %v408, %v637
          %v1979 = vadd.f32 %v409, %v683
          %v1980 = vadd.f32 %v410, %v729
          %v1981 = vadd.f32 %v411, %v775
          %v1982 = vadd.f32 %v412, %v821
          %v1983 = vadd.f32 %v413, %v867
          %v1984 = vadd.f32 %v414, %v913
          %v1985 = vadd.f32 %v415, %v959
          %v1986 = vadd.f32 %v416, %v1005
          %v1987 = vadd.f32 %v417, %v1051
          %v1988 = vadd.f32 %v418, %v1097
          %v1989 = vadd.f32 %v419, %v1143
          %v1990 = vadd.f32 %v420, %v1189
          %v1991 = vadd.f32 %v421, %v1235
          %v1992 = vadd.f32 %v422, %v1281
          %v1993 = vadd.f32 %v423, %v1327
          %v1994 = vadd.f32 %v424, %v1373
          %v1995 = vadd.f32 %v425, %v1419
          %v1996 = vadd.f32 %v426, %v1465
          %v1997 = vadd.f32 %v427, %v1511
          %v1998 = vadd.f32 %v428, %v1557
          %v1999 = vadd.f32 %v429, %v1603
          %v2000 = vadd.f32 %v430, %v1649
          %v2001 = vadd.f32 %v431, %v1695
          %v2002 = vadd.f32 %v432, %v1741
          %v2003 = vadd.f32 %v433, %v1787
          %v2004 = vadd.f32 %v434, %v1833
          %v2005 = vadd.f32 %v435, %v1879
          %v2006 = vadd.f32 %v436, %v1925
          %v2007 = vadd.f32 %v437, %v1971
          %2008 = vst.msk [vmem:[%s350] sm:$0xff] %vm502, %v1976
          %2009 = vst.msk [vmem:[%s350 + $0x8] sm:$0xff] %vm502, %v1977
          %2010 = vst.msk [vmem:[%s350 + $0x10] sm:$0xff] %vm502, %v1978
          %2011 = vst.msk [vmem:[%s350 + $0x18] sm:$0xff] %vm502, %v1979
          %2012 = vst.msk [vmem:[%s350 + $0x20] sm:$0xff] %vm502, %v1980
          %2013 = vst.msk [vmem:[%s350 + $0x28] sm:$0xff] %vm502, %v1981
          %2014 = vst.msk [vmem:[%s350 + $0x30] sm:$0xff] %vm502, %v1982
          %2015 = vst.msk [vmem:[%s350 + $0x38] sm:$0xff] %vm502, %v1983
          %2016 = vst.msk [vmem:[%s350 + $0x40] sm:$0xff] %vm502, %v1984
          %2017 = vst.msk [vmem:[%s350 + $0x48] sm:$0xff] %vm502, %v1985
          %2018 = vst.msk [vmem:[%s350 + $0x50] sm:$0xff] %vm502, %v1986
          %2019 = vst.msk [vmem:[%s350 + $0x58] sm:$0xff] %vm502, %v1987
          %2020 = vst.msk [vmem:[%s350 + $0x60] sm:$0xff] %vm502, %v1988
          %2021 = vst.msk [vmem:[%s350 + $0x68] sm:$0xff] %vm502, %v1989
          %2022 = vst.msk [vmem:[%s350 + $0x70] sm:$0xff] %vm502, %v1990
          %2023 = vst.msk [vmem:[%s350 + $0x78] sm:$0xff] %vm502, %v1991
          %2024 = vst.msk [vmem:[%s350 + $0x80] sm:$0xff] %vm502, %v1992
          %2025 = vst.msk [vmem:[%s350 + $0x88] sm:$0xff] %vm502, %v1993
          %2026 = vst.msk [vmem:[%s350 + $0x90] sm:$0xff] %vm502, %v1994
          %2027 = vst.msk [vmem:[%s350 + $0x98] sm:$0xff] %vm502, %v1995
          %2028 = vst.msk [vmem:[%s350 + $0xa0] sm:$0xff] %vm502, %v1996
          %2029 = vst.msk [vmem:[%s350 + $0xa8] sm:$0xff] %vm502, %v1997
          %2030 = vst.msk [vmem:[%s350 + $0xb0] sm:$0xff] %vm502, %v1998
          %2031 = vst.msk [vmem:[%s350 + $0xb8] sm:$0xff] %vm502, %v1999
          %2032 = vst.msk [vmem:[%s350 + $0xc0] sm:$0xff] %vm502, %v2000
          %2033 = vst.msk [vmem:[%s350 + $0xc8] sm:$0xff] %vm502, %v2001
          %2034 = vst.msk [vmem:[%s350 + $0xd0] sm:$0xff] %vm502, %v2002
          %2035 = vst.msk [vmem:[%s350 + $0xd8] sm:$0xff] %vm502, %v2003
          %2036 = vst.msk [vmem:[%s350 + $0xe0] sm:$0xff] %vm502, %v2004
          %2037 = vst.msk [vmem:[%s350 + $0xe8] sm:$0xff] %vm502, %v2005
          %2038 = vst.msk [vmem:[%s350 + $0xf0] sm:$0xff] %vm502, %v2006
          %2039 = vst.msk [vmem:[%s350 + $0xf8] sm:$0xff] %vm502, %v2007
        $region77: #{tpu_custom_call.1} parent=64 // pred_fallthru
          _
        %s2040 = sand.u32 %s95, 1
        %s2041 = sand.u32 %s95, 1
        %s2042 = smul.addr %s2041, 256
        %s2043 = scalar_lea.vmem [#allocation3], %s2042
        // Predicated region
        $region78: #{tpu_custom_call.1} parent=64 // pred_check
          %p2044 = pneg %p105
        $region79: #{tpu_custom_call.1} parent=64 // pred_check_branch
          %2046 = sbr.rel (%p2044) target = $region81
        $region80: #{tpu_custom_call.1} parent=64 // pred_region
          %s2047 = smul.addr %s17, 8
          %s2048 = scalar_lea.vmem %s2, %s2047
          // Predicated region
          $region82: #{tpu_custom_call.1} parent=80 // pred_check
            _
          $region83: #{tpu_custom_call.1} parent=80 // pred_check_branch
            %2050 = sbr.rel (0) target = $region85
          $region84: #{tpu_custom_call.1} parent=80 // pred_region
            // Predicated region
            $region86: #{tpu_custom_call.1} parent=84 // pred_check
              _
            $region87: #{tpu_custom_call.1} parent=84 // pred_check_branch
              %2052 = sbr.rel (0) target = $region89
            $region88: #{tpu_custom_call.1} parent=84 // pred_region
              // Predicated region
              $region101: #{tpu_custom_call.1} parent=88 // pred_check
                _
              $region102: #{tpu_custom_call.1} parent=88 // pred_check_branch
                %2129 = sbr.rel (0) target = $region104
              $region103: #{tpu_custom_call.1} parent=88 // pred_region
                loop: start=0, step=1, limit=1
                $region105: #{tpu_custom_call.1} parent=103 // loop_pre_header
                  _
                $region106: #{tpu_custom_call.1} parent=103 // loop_header
                  %s2131 = sphi 0, %s2135
                  %p2132 = scmp.ge.s32.totalorder %s2131, 1
                  %s2136 = sphi %s2043, %s2043
                  %s2137 = sphi %s2048, %s2048
                $region107: #{tpu_custom_call.1} parent=103 // loop_header_branch
                  %2134 = sbr.rel (%p2132) target = $region111
                $region108: #{tpu_custom_call.1} parent=103 // loop_body
                  %v2138 = vld [vmem:[%s2136] sm:$0xff]
                  %2139 = vst [vmem:[%s2137] sm:$0xff] %v2138
                  %v2140 = vld [vmem:[%s2136 + $0x8] sm:$0xff]
                  %2141 = vst [vmem:[%s2137 + $0x10] sm:$0xff] %v2140
                  %v2142 = vld [vmem:[%s2136 + $0x10] sm:$0xff]
                  %2143 = vst [vmem:[%s2137 + $0x20] sm:$0xff] %v2142
                  %v2144 = vld [vmem:[%s2136 + $0x18] sm:$0xff]
                  %2145 = vst [vmem:[%s2137 + $0x30] sm:$0xff] %v2144
                  %v2146 = vld [vmem:[%s2136 + $0x20] sm:$0xff]
                  %2147 = vst [vmem:[%s2137 + $0x40] sm:$0xff] %v2146
                  %v2148 = vld [vmem:[%s2136 + $0x28] sm:$0xff]
                  %2149 = vst [vmem:[%s2137 + $0x50] sm:$0xff] %v2148
                  %v2150 = vld [vmem:[%s2136 + $0x30] sm:$0xff]
                  %2151 = vst [vmem:[%s2137 + $0x60] sm:$0xff] %v2150
                  %v2152 = vld [vmem:[%s2136 + $0x38] sm:$0xff]
                  %2153 = vst [vmem:[%s2137 + $0x70] sm:$0xff] %v2152
                  %v2154 = vld [vmem:[%s2136 + $0x40] sm:$0xff]
                  %2155 = vst [vmem:[%s2137 + $0x80] sm:$0xff] %v2154
                  %v2156 = vld [vmem:[%s2136 + $0x48] sm:$0xff]
                  %2157 = vst [vmem:[%s2137 + $0x90] sm:$0xff] %v2156
                  %v2158 = vld [vmem:[%s2136 + $0x50] sm:$0xff]
                  %2159 = vst [vmem:[%s2137 + $0xa0] sm:$0xff] %v2158
                  %v2160 = vld [vmem:[%s2136 + $0x58] sm:$0xff]
                  %2161 = vst [vmem:[%s2137 + $0xb0] sm:$0xff] %v2160
                  %v2162 = vld [vmem:[%s2136 + $0x60] sm:$0xff]
                  %2163 = vst [vmem:[%s2137 + $0xc0] sm:$0xff] %v2162
                  %v2164 = vld [vmem:[%s2136 + $0x68] sm:$0xff]
                  %2165 = vst [vmem:[%s2137 + $0xd0] sm:$0xff] %v2164
                  %v2166 = vld [vmem:[%s2136 + $0x70] sm:$0xff]
                  %2167 = vst [vmem:[%s2137 + $0xe0] sm:$0xff] %v2166
                  %v2168 = vld [vmem:[%s2136 + $0x78] sm:$0xff]
                  %2169 = vst [vmem:[%s2137 + $0xf0] sm:$0xff] %v2168
                  %v2170 = vld [vmem:[%s2136 + $0x80] sm:$0xff]
                  %2171 = vst [vmem:[%s2137 + $0x100] sm:$0xff] %v2170
                  %v2172 = vld [vmem:[%s2136 + $0x88] sm:$0xff]
                  %2173 = vst [vmem:[%s2137 + $0x110] sm:$0xff] %v2172
                  %v2174 = vld [vmem:[%s2136 + $0x90] sm:$0xff]
                  %2175 = vst [vmem:[%s2137 + $0x120] sm:$0xff] %v2174
                  %v2176 = vld [vmem:[%s2136 + $0x98] sm:$0xff]
                  %2177 = vst [vmem:[%s2137 + $0x130] sm:$0xff] %v2176
                  %v2178 = vld [vmem:[%s2136 + $0xa0] sm:$0xff]
                  %2179 = vst [vmem:[%s2137 + $0x140] sm:$0xff] %v2178
                  %v2180 = vld [vmem:[%s2136 + $0xa8] sm:$0xff]
                  %2181 = vst [vmem:[%s2137 + $0x150] sm:$0xff] %v2180
                  %v2182 = vld [vmem:[%s2136 + $0xb0] sm:$0xff]
                  %2183 = vst [vmem:[%s2137 + $0x160] sm:$0xff] %v2182
                  %v2184 = vld [vmem:[%s2136 + $0xb8] sm:$0xff]
                  %2185 = vst [vmem:[%s2137 + $0x170] sm:$0xff] %v2184
                  %v2186 = vld [vmem:[%s2136 + $0xc0] sm:$0xff]
                  %2187 = vst [vmem:[%s2137 + $0x180] sm:$0xff] %v2186
                  %v2188 = vld [vmem:[%s2136 + $0xc8] sm:$0xff]
                  %2189 = vst [vmem:[%s2137 + $0x190] sm:$0xff] %v2188
                  %v2190 = vld [vmem:[%s2136 + $0xd0] sm:$0xff]
                  %2191 = vst [vmem:[%s2137 + $0x1a0] sm:$0xff] %v2190
                  %v2192 = vld [vmem:[%s2136 + $0xd8] sm:$0xff]
                  %2193 = vst [vmem:[%s2137 + $0x1b0] sm:$0xff] %v2192
                  %v2194 = vld [vmem:[%s2136 + $0xe0] sm:$0xff]
                  %2195 = vst [vmem:[%s2137 + $0x1c0] sm:$0xff] %v2194
                  %v2196 = vld [vmem:[%s2136 + $0xe8] sm:$0xff]
                  %2197 = vst [vmem:[%s2137 + $0x1d0] sm:$0xff] %v2196
                  %v2198 = vld [vmem:[%s2136 + $0xf0] sm:$0xff]
                  %2199 = vst [vmem:[%s2137 + $0x1e0] sm:$0xff] %v2198
                  %v2200 = vld [vmem:[%s2136 + $0xf8] sm:$0xff]
                  %2201 = vst [vmem:[%s2137 + $0x1f0] sm:$0xff] %v2200
                $region109: #{tpu_custom_call.1} parent=103 // loop_footer
                  %s2135 = sadd.s32 1, %s2131
                $region110: #{tpu_custom_call.1} parent=103 // loop_footer_branch
                  %2130 = sbr.rel target = $region106
                $region111: #{tpu_custom_call.1} parent=103 // loop_exit
                  _
              $region104: #{tpu_custom_call.1} parent=88 // pred_fallthru
                _
              // Predicated region
              $region112: #{tpu_custom_call.1} parent=88 // pred_check
                _
              $region113: #{tpu_custom_call.1} parent=88 // pred_check_branch
                %2203 = sbr.rel target = $region115
              $region114: #{tpu_custom_call.1} parent=88 // pred_region
                _
              $region115: #{tpu_custom_call.1} parent=88 // pred_fallthru
                _
            $region89: #{tpu_custom_call.1} parent=84 // pred_fallthru
              _
            // Predicated region
            $region90: #{tpu_custom_call.1} parent=84 // pred_check
              _
            $region91: #{tpu_custom_call.1} parent=84 // pred_check_branch
              %2054 = sbr.rel target = $region93
            $region92: #{tpu_custom_call.1} parent=84 // pred_region
              loop: start=0, step=1, limit=1
              $region94: #{tpu_custom_call.1} parent=92 // loop_pre_header
                _
              $region95: #{tpu_custom_call.1} parent=92 // loop_header
                %s2057 = sphi 0, %s2061
                %p2058 = scmp.ge.s32.totalorder %s2057, 1
                %s2062 = sphi %s2043, %s2043
                %s2063 = sphi %s2048, %s2048
              $region96: #{tpu_custom_call.1} parent=92 // loop_header_branch
                %2060 = sbr.rel (%p2058) target = $region100
              $region97: #{tpu_custom_call.1} parent=92 // loop_body
                %v2064 = vld [vmem:[%s2062] sm:$0xff]
                %2065 = vst [vmem:[%s2063] sm:$0xff] %v2064
                %v2066 = vld [vmem:[%s2062 + $0x8] sm:$0xff]
                %2067 = vst [vmem:[%s2063 + $0x10] sm:$0xff] %v2066
                %v2068 = vld [vmem:[%s2062 + $0x10] sm:$0xff]
                %2069 = vst [vmem:[%s2063 + $0x20] sm:$0xff] %v2068
                %v2070 = vld [vmem:[%s2062 + $0x18] sm:$0xff]
                %2071 = vst [vmem:[%s2063 + $0x30] sm:$0xff] %v2070
                %v2072 = vld [vmem:[%s2062 + $0x20] sm:$0xff]
                %2073 = vst [vmem:[%s2063 + $0x40] sm:$0xff] %v2072
                %v2074 = vld [vmem:[%s2062 + $0x28] sm:$0xff]
                %2075 = vst [vmem:[%s2063 + $0x50] sm:$0xff] %v2074
                %v2076 = vld [vmem:[%s2062 + $0x30] sm:$0xff]
                %2077 = vst [vmem:[%s2063 + $0x60] sm:$0xff] %v2076
                %v2078 = vld [vmem:[%s2062 + $0x38] sm:$0xff]
                %2079 = vst [vmem:[%s2063 + $0x70] sm:$0xff] %v2078
                %v2080 = vld [vmem:[%s2062 + $0x40] sm:$0xff]
                %2081 = vst [vmem:[%s2063 + $0x80] sm:$0xff] %v2080
                %v2082 = vld [vmem:[%s2062 + $0x48] sm:$0xff]
                %2083 = vst [vmem:[%s2063 + $0x90] sm:$0xff] %v2082
                %v2084 = vld [vmem:[%s2062 + $0x50] sm:$0xff]
                %2085 = vst [vmem:[%s2063 + $0xa0] sm:$0xff] %v2084
                %v2086 = vld [vmem:[%s2062 + $0x58] sm:$0xff]
                %2087 = vst [vmem:[%s2063 + $0xb0] sm:$0xff] %v2086
                %v2088 = vld [vmem:[%s2062 + $0x60] sm:$0xff]
                %2089 = vst [vmem:[%s2063 + $0xc0] sm:$0xff] %v2088
                %v2090 = vld [vmem:[%s2062 + $0x68] sm:$0xff]
                %2091 = vst [vmem:[%s2063 + $0xd0] sm:$0xff] %v2090
                %v2092 = vld [vmem:[%s2062 + $0x70] sm:$0xff]
                %2093 = vst [vmem:[%s2063 + $0xe0] sm:$0xff] %v2092
                %v2094 = vld [vmem:[%s2062 + $0x78] sm:$0xff]
                %2095 = vst [vmem:[%s2063 + $0xf0] sm:$0xff] %v2094
                %v2096 = vld [vmem:[%s2062 + $0x80] sm:$0xff]
                %2097 = vst [vmem:[%s2063 + $0x100] sm:$0xff] %v2096
                %v2098 = vld [vmem:[%s2062 + $0x88] sm:$0xff]
                %2099 = vst [vmem:[%s2063 + $0x110] sm:$0xff] %v2098
                %v2100 = vld [vmem:[%s2062 + $0x90] sm:$0xff]
                %2101 = vst [vmem:[%s2063 + $0x120] sm:$0xff] %v2100
                %v2102 = vld [vmem:[%s2062 + $0x98] sm:$0xff]
                %2103 = vst [vmem:[%s2063 + $0x130] sm:$0xff] %v2102
                %v2104 = vld [vmem:[%s2062 + $0xa0] sm:$0xff]
                %2105 = vst [vmem:[%s2063 + $0x140] sm:$0xff] %v2104
                %v2106 = vld [vmem:[%s2062 + $0xa8] sm:$0xff]
                %2107 = vst [vmem:[%s2063 + $0x150] sm:$0xff] %v2106
                %v2108 = vld [vmem:[%s2062 + $0xb0] sm:$0xff]
                %2109 = vst [vmem:[%s2063 + $0x160] sm:$0xff] %v2108
                %v2110 = vld [vmem:[%s2062 + $0xb8] sm:$0xff]
                %2111 = vst [vmem:[%s2063 + $0x170] sm:$0xff] %v2110
                %v2112 = vld [vmem:[%s2062 + $0xc0] sm:$0xff]
                %2113 = vst [vmem:[%s2063 + $0x180] sm:$0xff] %v2112
                %v2114 = vld [vmem:[%s2062 + $0xc8] sm:$0xff]
                %2115 = vst [vmem:[%s2063 + $0x190] sm:$0xff] %v2114
                %v2116 = vld [vmem:[%s2062 + $0xd0] sm:$0xff]
                %2117 = vst [vmem:[%s2063 + $0x1a0] sm:$0xff] %v2116
                %v2118 = vld [vmem:[%s2062 + $0xd8] sm:$0xff]
                %2119 = vst [vmem:[%s2063 + $0x1b0] sm:$0xff] %v2118
                %v2120 = vld [vmem:[%s2062 + $0xe0] sm:$0xff]
                %2121 = vst [vmem:[%s2063 + $0x1c0] sm:$0xff] %v2120
                %v2122 = vld [vmem:[%s2062 + $0xe8] sm:$0xff]
                %2123 = vst [vmem:[%s2063 + $0x1d0] sm:$0xff] %v2122
                %v2124 = vld [vmem:[%s2062 + $0xf0] sm:$0xff]
                %2125 = vst [vmem:[%s2063 + $0x1e0] sm:$0xff] %v2124
                %v2126 = vld [vmem:[%s2062 + $0xf8] sm:$0xff]
                %2127 = vst [vmem:[%s2063 + $0x1f0] sm:$0xff] %v2126
              $region98: #{tpu_custom_call.1} parent=92 // loop_footer
                %s2061 = sadd.s32 1, %s2057
              $region99: #{tpu_custom_call.1} parent=92 // loop_footer_branch
                %2056 = sbr.rel target = $region95
              $region100: #{tpu_custom_call.1} parent=92 // loop_exit
                _
            $region93: #{tpu_custom_call.1} parent=84 // pred_fallthru
              _
          $region85: #{tpu_custom_call.1} parent=80 // pred_fallthru
            _
          %2204 = vnop
        $region81: #{tpu_custom_call.1} parent=64 // pred_fallthru
          _
      $region65: #{tpu_custom_call.1} parent=5 // pred_fallthru
        _
      %p2205 = scmp.le.s32.totalorder 2, %s8
      // Predicated region
      $region116: #{tpu_custom_call.1} parent=5 // pred_check
        %p2206 = pneg %p2205
      $region117: #{tpu_custom_call.1} parent=5 // pred_check_branch
        %2208 = sbr.rel (%p2206) target = $region119
      $region118: #{tpu_custom_call.1} parent=5 // pred_region
        %s2209 = ssub.s32 %s8, 2
        // Predicated region
        $region120: #{tpu_custom_call.1} parent=118 // pred_check
          %p2210 = pneg %p111
        $region121: #{tpu_custom_call.1} parent=118 // pred_check_branch
          %2212 = sbr.rel (%p2210) target = $region123
        $region122: #{tpu_custom_call.1} parent=118 // pred_region
          %s2213 = sand.u32 %s96, 1
          %s2214 = sand.u32 %s96, 1
          %s2215 = smul.addr %s2214, 256
          %s2216 = scalar_lea.vmem [#allocation3], %s2215
        $region123: #{tpu_custom_call.1} parent=118 // pred_fallthru
          _
      $region119: #{tpu_custom_call.1} parent=5 // pred_fallthru
        _
    $region6: #{tpu_custom_call.1} parent=1 // loop_footer
      %s12 = sadd.s32 1, %s8
    $region7: #{tpu_custom_call.1} parent=1 // loop_footer_branch
      %7 = sbr.rel target = $region3
    $region8: #{tpu_custom_call.1} parent=1 // loop_exit
      _

</llo_original>
